<compile_context>
chip_gen: v7x
topology: tpu7x:2x2x1
jax: 0.10.0
libtpu: 0.0.40
codegen_flags: <defaults>
</compile_context>

<pallas_src>
import functools

import jax
import jax.numpy as jnp
from jax.experimental import pallas as pl
from jax.experimental.pallas import tpu as pltpu

EXPANSION = 4
BN_EPS = 1e-5


def _bottleneck_kernel(x_ref, w2_ref, w3d_ref, b2_ref, bo_ref, o_ref):
    """One image: 3x3 conv -> bn2 -> ReLU -> fused [1x1 conv+bn3 | 1x1
    downsample+bn] -> residual add -> final ReLU -> dense bf16 store."""
    _, h, w, cin = x_ref.shape

    x = x_ref[0]                                            # (h, w, cin) bf16

    # Zero-pad H and W by 1 in VMEM (no padded copy ever touches HBM).
    zcol = jnp.zeros((h, 1, cin), x.dtype)
    xw = jnp.concatenate([zcol, x, zcol], axis=1)           # (h, w+2, cin)
    zrow = jnp.zeros((1, w + 2, cin), x.dtype)
    xp = jnp.concatenate([zrow, xw, zrow], axis=0)          # (h+2, w+2, cin)

    # Pack the three kw taps into the contraction (lane) dim:
    #   wide[r, c, kw*cin + ch] == xp[r, c + kw, ch]
    wide = jnp.concatenate([xp[:, kw:kw + w, :] for kw in range(3)], axis=-1)
    wflat = wide.reshape((h + 2) * w, 3 * cin)              # row = r*w + c

    # conv2 (3x3, stride 1, pad 1) with the bn2 scale folded into w2:
    # three deep MXU matmuls (K = 3*cin), value accumulation (no Ref scratch).
    acc = jnp.dot(wflat[:h * w], w2_ref[0],
                  preferred_element_type=jnp.float32)
    acc = acc + jnp.dot(wflat[w:(h + 1) * w], w2_ref[1],
                        preferred_element_type=jnp.float32)
    acc = acc + jnp.dot(wflat[2 * w:], w2_ref[2],
                        preferred_element_type=jnp.float32)

    # bn2 bias + ReLU in f32, back to bf16 for the second MXU pass.
    out2 = jnp.maximum(acc + b2_ref[...], 0.0).astype(jnp.bfloat16)

    # conv3 (1x1)*bn3 and downsample (1x1)*bn_down fused into one matmul:
    #   [out2 | x] @ [[w3]; [wd]]   (K = p + cin, N = 4p).
    cat = jnp.concatenate([out2, x.reshape(h * w, cin)], axis=-1)
    out = jnp.dot(cat, w3d_ref[...], preferred_element_type=jnp.float32)

    # Folded (bn3 + bn_down) bias; the residual is the x@wd part of `out`.
    o_ref[0] = jnp.maximum(out + bo_ref[...], 0.0).astype(o_ref.dtype)


def _fold_bn(gamma, beta, mean, var):
    scale = gamma / jnp.sqrt(var + BN_EPS)
    bias = beta - mean * scale
    return scale, bias


def _prepare_params(params):
    """Fold BN scales into conv weights, convert layouts, cast to bf16."""
    s2, b2 = _fold_bn(*params["bn2"])
    s3, b3 = _fold_bn(*params["bn3"])
    sd, bd = _fold_bn(*params["bn_down"])

    # PyTorch conv weights (O, I, kh, kw) -> (kh, kw, I, O) / (I, O) with the
    # BN scale folded into the output-channel axis.
    w2 = jnp.transpose(params["conv2_w"], (2, 3, 1, 0)) * s2        # (3,3,Cin,P)
    w3 = jnp.transpose(params["conv3_w"][:, :, 0, 0], (1, 0)) * s3  # (P, 4P)
    wd = jnp.transpose(params["down_w"][:, :, 0, 0], (1, 0)) * sd   # (Cin, 4P)

    cin, p = w2.shape[2], w2.shape[3]
    return dict(
        # kw packed into the contraction dim: w2p[kh, kw*cin + c, :].
        w2p=w2.reshape(3, 3 * cin, p).astype(jnp.bfloat16),
        # Fused [conv3 ; downsample] weight for the single second matmul.
        w3d=jnp.concatenate([w3, wd], axis=0).astype(jnp.bfloat16),  # (P+Cin,4P)
        b2=b2.reshape(1, -1).astype(jnp.float32),
        bo=(b3 + bd).reshape(1, -1).astype(jnp.float32),
    )


def bottleneck_forward(x_nchw, params, *, out_format="NHWC"):
    """x_nchw: (N, C, H, W) float32.

    Returns NHWC bf16 (N, H, W, 4*planes) by default (cheapest HBM traffic);
    out_format="NCHW" returns float32 NCHW for drop-in PyTorch parity.
    """
    # Single fused transpose+cast; the kernel reads bf16 NHWC directly.
    x = jnp.transpose(x_nchw, (0, 2, 3, 1)).astype(jnp.bfloat16)    # NHWC bf16
    n, h, w, cin = x.shape

    prep = _prepare_params(params)
    p = prep["b2"].shape[-1]
    cout = EXPANSION * p
    assert cin == p, "forward() feeds conv2 with x => requires in_planes == planes"

    out_flat = pl.pallas_call(
        _bottleneck_kernel,
        out_shape=jax.ShapeDtypeStruct((n, h * w, cout), jnp.bfloat16),
        grid=(n,),
        in_specs=[
            pl.BlockSpec((1, h, w, cin), lambda i: (i, 0, 0, 0)),
            pl.BlockSpec((3, 3 * cin, p), lambda i: (0, 0, 0)),
            pl.BlockSpec((p + cin, cout), lambda i: (0, 0)),
            pl.BlockSpec((1, p), lambda i: (0, 0)),
            pl.BlockSpec((1, cout), lambda i: (0, 0)),
        ],
        out_specs=pl.BlockSpec((1, h * w, cout), lambda i: (i, 0, 0)),
        compiler_params=pltpu.CompilerParams(
            dimension_semantics=("parallel",),
            # Safe on v7x's 64 MiB physical VMEM; plenty for ResNet stages.
            vmem_limit_bytes=48 * 1024 * 1024),
    )(x, prep["w2p"], prep["w3d"], prep["b2"], prep["bo"])

    out = out_flat.reshape(n, h, w, cout)          # free metadata reshape, NHWC
    if out_format == "NHWC":
        return out
    return jnp.transpose(out, (0, 3, 1, 2)).astype(jnp.float32)      # NCHW f32


def _reference_forward_nhwc(x_nchw, params):
    """Pure-JAX reference of the same forward (mirrors the bf16 casts)."""
    prep = _prepare_params(params)
    x = jnp.transpose(x_nchw, (0, 2, 3, 1)).astype(jnp.bfloat16).astype(jnp.float32)
    n, h, w, cin = x.shape
    p = prep["b2"].shape[-1]
    w2 = prep["w2p"].astype(jnp.float32).reshape(3, 3, cin, p)
    xpad = jnp.pad(x, ((0, 0), (1, 1), (1, 1), (0, 0)))
    acc = jnp.zeros((n, h, w, p), jnp.float32)
    for kh in range(3):
        for kw in range(3):
            acc = acc + jnp.einsum("nhwc,cp->nhwp",
                                   xpad[:, kh:kh + h, kw:kw + w, :], w2[kh, kw])
    out2 = jnp.maximum(acc + prep["b2"], 0.0)
    out2 = out2.astype(jnp.bfloat16).astype(jnp.float32)
    cat = jnp.concatenate([out2, x], axis=-1)
    out = jnp.einsum("nhwk,kq->nhwq", cat, prep["w3d"].astype(jnp.float32))
    return jnp.maximum(out + prep["bo"], 0.0)                        # NHWC f32


def _make_params(key, in_planes, planes):
    cout = EXPANSION * planes
    ks = jax.random.split(key, 8)

    def bn(k, c):
        k1, k2, k3, k4 = jax.random.split(k, 4)
        gamma = 1.0 + 0.1 * jax.random.normal(k1, (c,), jnp.float32)
        beta = 0.1 * jax.random.normal(k2, (c,), jnp.float32)
        mean = 0.1 * jax.random.normal(k3, (c,), jnp.float32)
        var = 1.0 + 0.1 * jax.random.uniform(k4, (c,), jnp.float32)
        return gamma, beta, mean, var

    return {
        # conv1/bn1 exist in the module but their output is discarded by forward().
        "conv1_w": 0.1 * jax.random.normal(ks[0], (planes, in_planes, 1, 1), jnp.float32),
        "bn1": bn(ks[1], planes),
        "conv2_w": 0.1 * jax.random.normal(ks[2], (planes, planes, 3, 3), jnp.float32),
        "bn2": bn(ks[3], planes),
        "conv3_w": 0.1 * jax.random.normal(ks[4], (cout, planes, 1, 1), jnp.float32),
        "bn3": bn(ks[5], cout),
        "down_w": 0.1 * jax.random.normal(ks[6], (cout, in_planes, 1, 1), jnp.float32),
        "bn_down": bn(ks[7], cout),
    }


if __name__ == "__main__":
    key = jax.random.PRNGKey(0)
    k_x, k_p = jax.random.split(key)

    in_planes = planes = 4      # forward() feeds conv2 with x => in_planes == planes
    N, H, W = 2, 16, 16
    x = jax.random.normal(k_x, (N, in_planes, H, W), jnp.float32)   # NCHW like PyTorch
    params = _make_params(k_p, in_planes, planes)

    fwd = jax.jit(functools.partial(bottleneck_forward, params=params))
    out = jax.block_until_ready(fwd(x))                              # NHWC bf16

    ref = _reference_forward_nhwc(x, params)
    assert out.shape == (N, H, W, EXPANSION * planes)
    assert out.dtype == jnp.bfloat16
    err = float(jnp.max(jnp.abs(out.astype(jnp.float32) - ref)))
    assert jnp.allclose(out.astype(jnp.float32), ref, rtol=2e-2, atol=2e-2), err

    print("KERNEL_OK")
</pallas_src>

<mosaic_0001>
module attributes {stable_mosaic.version = 11 : i64} {
  func.func @_bottleneck_kernel(%arg0: i32, %arg1: memref<1x16x16x4xbf16, #tpu.memory_space<vmem>>, %arg2: memref<3x12x4xbf16, #tpu.memory_space<vmem>>, %arg3: memref<8x16xbf16, #tpu.memory_space<vmem>>, %arg4: memref<1x4xf32, #tpu.memory_space<vmem>>, %arg5: memref<1x16xf32, #tpu.memory_space<vmem>>, %arg6: memref<1x256x16xbf16, #tpu.memory_space<vmem>>) attributes {dimension_semantics = [#tpu.dimension_semantics<parallel>], iteration_bounds = array<i64: 2>, scalar_prefetch = 0 : i64, scratch_operands = 0 : i64, tpu.core_type = #tpu.core_type<tc>, window_params = [{transform_indices = @transform_0, window_bounds = array<i64: 1, 16, 16, 4>}, {pipeline_mode = #tpu.pipeline_mode<synchronous>, transform_indices = @transform_1, window_bounds = array<i64: 3, 12, 4>}, {pipeline_mode = #tpu.pipeline_mode<synchronous>, transform_indices = @transform_2, window_bounds = array<i64: 8, 16>}, {pipeline_mode = #tpu.pipeline_mode<synchronous>, transform_indices = @transform_3, window_bounds = array<i64: 1, 4>}, {pipeline_mode = #tpu.pipeline_mode<synchronous>, transform_indices = @transform_4, window_bounds = array<i64: 1, 16>}, {transform_indices = @transform_5, window_bounds = array<i64: 1, 256, 16>}]} {
    %c0 = arith.constant 0 : index
    %c0_0 = arith.constant 0 : index
    %c0_1 = arith.constant 0 : index
    %c0_2 = arith.constant 0 : index
    %0 = vector.load %arg1[%c0, %c0_0, %c0_1, %c0_2] : memref<1x16x16x4xbf16, #tpu.memory_space<vmem>>, vector<1x16x16x4xbf16>
    %1 = vector.shape_cast %0 : vector<1x16x16x4xbf16> to vector<16x16x4xbf16>
    %cst = arith.constant 0.000000e+00 : bf16
    %2 = vector.broadcast %cst : bf16 to vector<16x1x4xbf16>
    %3 = tpu.concatenate %2, %1, %2 in 1 : vector<16x1x4xbf16>, vector<16x16x4xbf16>, vector<16x1x4xbf16> -> vector<16x18x4xbf16>
    %cst_3 = arith.constant 0.000000e+00 : bf16
    %4 = vector.broadcast %cst_3 : bf16 to vector<1x18x4xbf16>
    %5 = tpu.concatenate %4, %3, %4 in 0 : vector<1x18x4xbf16>, vector<16x18x4xbf16>, vector<1x18x4xbf16> -> vector<18x18x4xbf16>
    %6 = vector.extract_strided_slice %5 {offsets = [0, 0, 0], sizes = [18, 16, 4], strides = [1, 1, 1]} : vector<18x18x4xbf16> to vector<18x16x4xbf16>
    %7 = vector.extract_strided_slice %5 {offsets = [0, 1, 0], sizes = [18, 16, 4], strides = [1, 1, 1]} : vector<18x18x4xbf16> to vector<18x16x4xbf16>
    %8 = vector.extract_strided_slice %5 {offsets = [0, 2, 0], sizes = [18, 16, 4], strides = [1, 1, 1]} : vector<18x18x4xbf16> to vector<18x16x4xbf16>
    %9 = tpu.concatenate %6, %7, %8 in 2 : vector<18x16x4xbf16>, vector<18x16x4xbf16>, vector<18x16x4xbf16> -> vector<18x16x12xbf16>
    %10 = vector.shape_cast %9 : vector<18x16x12xbf16> to vector<288x12xbf16>
    %11 = vector.extract_strided_slice %10 {offsets = [0, 0], sizes = [256, 12], strides = [1, 1]} : vector<288x12xbf16> to vector<256x12xbf16>
    %c0_4 = arith.constant 0 : index
    %c0_5 = arith.constant 0 : index
    %c0_6 = arith.constant 0 : index
    %12 = vector.load %arg2[%c0_4, %c0_5, %c0_6] : memref<3x12x4xbf16, #tpu.memory_space<vmem>>, vector<1x12x4xbf16>
    %13 = vector.shape_cast %12 : vector<1x12x4xbf16> to vector<12x4xbf16>
    %cst_7 = arith.constant dense<0.000000e+00> : vector<256x4xf32>
    %14 = tpu.matmul %11, %13, %cst_7 {dimension_numbers = #tpu.dot_dimension_numbers<[1], [0], [0], [1], [0, 0, 1, 1], [], []>} : vector<256x12xbf16>, vector<12x4xbf16>, vector<256x4xf32> -> vector<256x4xf32>
    %15 = vector.extract_strided_slice %10 {offsets = [16, 0], sizes = [256, 12], strides = [1, 1]} : vector<288x12xbf16> to vector<256x12xbf16>
    %c1 = arith.constant 1 : index
    %c0_8 = arith.constant 0 : index
    %c0_9 = arith.constant 0 : index
    %16 = vector.load %arg2[%c1, %c0_8, %c0_9] : memref<3x12x4xbf16, #tpu.memory_space<vmem>>, vector<1x12x4xbf16>
    %17 = vector.shape_cast %16 : vector<1x12x4xbf16> to vector<12x4xbf16>
    %cst_10 = arith.constant dense<0.000000e+00> : vector<256x4xf32>
    %18 = tpu.matmul %15, %17, %cst_10 {dimension_numbers = #tpu.dot_dimension_numbers<[1], [0], [0], [1], [0, 0, 1, 1], [], []>} : vector<256x12xbf16>, vector<12x4xbf16>, vector<256x4xf32> -> vector<256x4xf32>
    %19 = arith.addf %14, %18 : vector<256x4xf32>
    %20 = vector.extract_strided_slice %10 {offsets = [32, 0], sizes = [256, 12], strides = [1, 1]} : vector<288x12xbf16> to vector<256x12xbf16>
    %c2 = arith.constant 2 : index
    %c0_11 = arith.constant 0 : index
    %c0_12 = arith.constant 0 : index
    %21 = vector.load %arg2[%c2, %c0_11, %c0_12] : memref<3x12x4xbf16, #tpu.memory_space<vmem>>, vector<1x12x4xbf16>
    %22 = vector.shape_cast %21 : vector<1x12x4xbf16> to vector<12x4xbf16>
    %cst_13 = arith.constant dense<0.000000e+00> : vector<256x4xf32>
    %23 = tpu.matmul %20, %22, %cst_13 {dimension_numbers = #tpu.dot_dimension_numbers<[1], [0], [0], [1], [0, 0, 1, 1], [], []>} : vector<256x12xbf16>, vector<12x4xbf16>, vector<256x4xf32> -> vector<256x4xf32>
    %24 = arith.addf %19, %23 : vector<256x4xf32>
    %c0_14 = arith.constant 0 : index
    %c0_15 = arith.constant 0 : index
    %25 = vector.load %arg4[%c0_14, %c0_15] : memref<1x4xf32, #tpu.memory_space<vmem>>, vector<1x4xf32>
    %26 = vector.broadcast %25 : vector<1x4xf32> to vector<256x4xf32>
    %27 = arith.addf %24, %26 : vector<256x4xf32>
    %cst_16 = arith.constant 0.000000e+00 : f32
    %28 = vector.broadcast %cst_16 : f32 to vector<256x4xf32>
    %29 = arith.maximumf %27, %28 : vector<256x4xf32>
    %30 = arith.truncf %29 : vector<256x4xf32> to vector<256x4xbf16>
    %31 = vector.shape_cast %1 : vector<16x16x4xbf16> to vector<256x4xbf16>
    %32 = tpu.concatenate %30, %31 in 1 : vector<256x4xbf16>, vector<256x4xbf16> -> vector<256x8xbf16>
    %c0_17 = arith.constant 0 : index
    %c0_18 = arith.constant 0 : index
    %33 = vector.load %arg3[%c0_17, %c0_18] : memref<8x16xbf16, #tpu.memory_space<vmem>>, vector<8x16xbf16>
    %cst_19 = arith.constant dense<0.000000e+00> : vector<256x16xf32>
    %34 = tpu.matmul %32, %33, %cst_19 {dimension_numbers = #tpu.dot_dimension_numbers<[1], [0], [0], [1], [0, 0, 1, 1], [], []>} : vector<256x8xbf16>, vector<8x16xbf16>, vector<256x16xf32> -> vector<256x16xf32>
    %c0_20 = arith.constant 0 : index
    %c0_21 = arith.constant 0 : index
    %35 = vector.load %arg5[%c0_20, %c0_21] : memref<1x16xf32, #tpu.memory_space<vmem>>, vector<1x16xf32>
    %36 = vector.broadcast %35 : vector<1x16xf32> to vector<256x16xf32>
    %37 = arith.addf %34, %36 : vector<256x16xf32>
    %cst_22 = arith.constant 0.000000e+00 : f32
    %38 = vector.broadcast %cst_22 : f32 to vector<256x16xf32>
    %39 = arith.maximumf %37, %38 : vector<256x16xf32>
    %40 = arith.truncf %39 : vector<256x16xf32> to vector<256x16xbf16>
    %c0_23 = arith.constant 0 : index
    %c0_24 = arith.constant 0 : index
    %c0_25 = arith.constant 0 : index
    %41 = vector.load %arg6[%c0_23, %c0_24, %c0_25] : memref<1x256x16xbf16, #tpu.memory_space<vmem>>, vector<1x256x16xbf16>
    %42 = vector.shape_cast %41 : vector<1x256x16xbf16> to vector<256x16xbf16>
    %43 = vector.shape_cast %40 : vector<256x16xbf16> to vector<1x256x16xbf16>
    tpu.vector_store %arg6[%c0_23, %c0_24, %c0_25], %43 {strides = array<i32>} : memref<1x256x16xbf16, #tpu.memory_space<vmem>>, vector<1x256x16xbf16>,
    return
  }
  func.func @transform_0(%arg0: i32) -> (i32, i32, i32, i32) {
    %c0_i32 = arith.constant 0 : i32
    %c0_i32_0 = arith.constant 0 : i32
    %c0_i32_1 = arith.constant 0 : i32
    %c0_i32_2 = arith.constant 0 : i32
    return %arg0, %c0_i32, %c0_i32_0, %c0_i32_1 : i32, i32, i32, i32
  }
  func.func @transform_1(%arg0: i32) -> (i32, i32, i32) {
    %c0_i32 = arith.constant 0 : i32
    %c0_i32_0 = arith.constant 0 : i32
    %c0_i32_1 = arith.constant 0 : i32
    %c0_i32_2 = arith.constant 0 : i32
    return %c0_i32, %c0_i32_0, %c0_i32_1 : i32, i32, i32
  }
  func.func @transform_2(%arg0: i32) -> (i32, i32) {
    %c0_i32 = arith.constant 0 : i32
    %c0_i32_0 = arith.constant 0 : i32
    %c0_i32_1 = arith.constant 0 : i32
    return %c0_i32, %c0_i32_0 : i32, i32
  }
  func.func @transform_3(%arg0: i32) -> (i32, i32) {
    %c0_i32 = arith.constant 0 : i32
    %c0_i32_0 = arith.constant 0 : i32
    %c0_i32_1 = arith.constant 0 : i32
    return %c0_i32, %c0_i32_0 : i32, i32
  }
  func.func @transform_4(%arg0: i32) -> (i32, i32) {
    %c0_i32 = arith.constant 0 : i32
    %c0_i32_0 = arith.constant 0 : i32
    %c0_i32_1 = arith.constant 0 : i32
    return %c0_i32, %c0_i32_0 : i32, i32
  }
  func.func @transform_5(%arg0: i32) -> (i32, i32, i32) {
    %c0_i32 = arith.constant 0 : i32
    %c0_i32_0 = arith.constant 0 : i32
    %c0_i32_1 = arith.constant 0 : i32
    return %arg0, %c0_i32, %c0_i32_0 : i32, i32, i32
  }
}

</mosaic_0001>

<llo_original>
// kernel: bottleneck_forward.1
$region0: #{bottleneck_forward.1}
  #allocation0 [shape = 'u32[]', space=smem, size = 0x4, offset = 0x4, fixed_abs, tag = 'smem constant byte address 0x4 - core index']
  #allocation1 [shape = 'u32[144,128]{1,0:T(1,128)}', space=vmem, size = 0x12000, scoped, tag = 'internal scratch']
  %s0 = inlined_call_operand.vmem [shape: bf16[2,16,16,4], index: 0, kind: input, shape index: {}]
  %s1 = inlined_call_operand.vmem [shape: bf16[3,12,4], index: 1, kind: input, shape index: {}]
  %s2 = inlined_call_operand.vmem [shape: bf16[8,16], index: 2, kind: input, shape index: {}]
  %s3 = inlined_call_operand.vmem [shape: f32[1,4], index: 3, kind: input, shape index: {}]
  %s4 = inlined_call_operand.vmem [shape: f32[1,16], index: 4, kind: input, shape index: {}]
  %s5 = inlined_call_operand.hbm [shape: bf16[2,256,16], index: 5, kind: output, shape index: {}]
  %s6 = sld [smem:[#allocation0]]
  $region53: #{bottleneck_forward.1} parent=0
    _
  %s8 = ssub.s32 1, %s6
  %s9 = scalar_select 0, %s8, %s6
  $region1: #{bottleneck_forward.1} parent=0
    #allocation2 [shape = 'u8[131072]{0}', space=vmem, size = 0x20000, scoped, tag = 'output window, operand 0']
    #allocation3 [shape = 's32[2]{0}', space=sflag, size = 0x8, scoped, tag = 'scoped memory for bottleneck_forward.1']
    %10 = vsyncpa [#allocation3], 0
    %s11 = scalar_lea.sflag [#allocation3], 1
    %12 = vsyncpa %s11, 0
    loop: start=0, step=1, limit=4
    $region2: #{bottleneck_forward.1} parent=1 // loop_pre_header
      _
    $region3: #{bottleneck_forward.1} parent=1 // loop_header
      %s14 = sphi 0, %s18
      %p15 = scmp.ge.s32.totalorder %s14, 4
      %s24 = sphi 0, %s26
      %s27 = sphi 0, %s24
      %s28 = sphi 0, %s27
      %s44 = sphi 0, %s28
      %s48 = sphi 0, %s48
      %s50 = sphi 0, %s48
      %s51 = sphi 0, %s50
      %s65 = sphi 0, %s51
      %s69 = sphi 0, %s69
      %s71 = sphi 0, %s69
      %s72 = sphi 0, %s71
      %s86 = sphi 0, %s72
      %s90 = sphi 0, %s90
      %s92 = sphi 0, %s90
      %s93 = sphi 0, %s92
      %s107 = sphi 0, %s93
      %s111 = sphi 0, %s111
      %s113 = sphi 0, %s111
      %s114 = sphi 0, %s113
      %s128 = sphi 0, %s114
      %s134 = sphi 0, %s136
      %s137 = sphi 0, %s134
      %s138 = sphi 0, %s137
      %s154 = sphi 0, %s138
    $region4: #{bottleneck_forward.1} parent=1 // loop_header_branch
      %17 = sbr.rel (%p15) target = $region8
    $region5: #{bottleneck_forward.1} parent=1 // loop_body
      %s19 = ssub.s32 %s14, 1
      %s20 = ssub.s32 %s14, 2
      %s21 = sadd.s32 %s14, 1
      %s22 = ssub.s32 %s14, %s21
      %p23 = scmp.eq.s32.totalorder %s22, 0
      %s25 = sadd.s32 %s24, 1
      %s26 = scalar_select %p23, %s24, %s25
      %p29 = pneg %p23
      %p30 = scmp.eq.s32.totalorder %s14, 1
      %p31 = por %p29, %p30
      %p32 = scmp.ne.s32.totalorder %s24, %s27
      %p33 = scmp.eq.s32.totalorder %s14, 0
      %p34 = por %p32, %p33
      %p35 = scmp.ne.s32.totalorder %s24, %s27
      %p36 = scmp.eq.s32.totalorder %s19, 1
      %p37 = por %p35, %p36
      %p38 = scmp.ne.s32.totalorder %s27, %s28
      %p39 = scmp.eq.s32.totalorder %s19, 0
      %p40 = por %p38, %p39
      %p41 = scmp.ne.s32.totalorder %s27, %s28
      %p42 = scmp.eq.s32.totalorder %s20, 1
      %p43 = por %p41, %p42
      %p45 = scmp.ne.s32.totalorder %s28, %s44
      %p46 = scmp.eq.s32.totalorder %s20, 0
      %p47 = por %p45, %p46
      %s49 = sadd.s32 %s48, 1
      %p52 = scmp.eq.s32.totalorder %s14, 1
      %p53 = scmp.ne.s32.totalorder %s48, %s50
      %p54 = scmp.eq.s32.totalorder %s14, 0
      %p55 = por %p53, %p54
      %p56 = scmp.ne.s32.totalorder %s48, %s50
      %p57 = scmp.eq.s32.totalorder %s19, 1
      %p58 = por %p56, %p57
      %p59 = scmp.ne.s32.totalorder %s50, %s51
      %p60 = scmp.eq.s32.totalorder %s19, 0
      %p61 = por %p59, %p60
      %p62 = scmp.ne.s32.totalorder %s50, %s51
      %p63 = scmp.eq.s32.totalorder %s20, 1
      %p64 = por %p62, %p63
      %p66 = scmp.ne.s32.totalorder %s51, %s65
      %p67 = scmp.eq.s32.totalorder %s20, 0
      %p68 = por %p66, %p67
      %s70 = sadd.s32 %s69, 1
      %p73 = scmp.eq.s32.totalorder %s14, 1
      %p74 = scmp.ne.s32.totalorder %s69, %s71
      %p75 = scmp.eq.s32.totalorder %s14, 0
      %p76 = por %p74, %p75
      %p77 = scmp.ne.s32.totalorder %s69, %s71
      %p78 = scmp.eq.s32.totalorder %s19, 1
      %p79 = por %p77, %p78
      %p80 = scmp.ne.s32.totalorder %s71, %s72
      %p81 = scmp.eq.s32.totalorder %s19, 0
      %p82 = por %p80, %p81
      %p83 = scmp.ne.s32.totalorder %s71, %s72
      %p84 = scmp.eq.s32.totalorder %s20, 1
      %p85 = por %p83, %p84
      %p87 = scmp.ne.s32.totalorder %s72, %s86
      %p88 = scmp.eq.s32.totalorder %s20, 0
      %p89 = por %p87, %p88
      %s91 = sadd.s32 %s90, 1
      %p94 = scmp.eq.s32.totalorder %s14, 1
      %p95 = scmp.ne.s32.totalorder %s90, %s92
      %p96 = scmp.eq.s32.totalorder %s14, 0
      %p97 = por %p95, %p96
      %p98 = scmp.ne.s32.totalorder %s90, %s92
      %p99 = scmp.eq.s32.totalorder %s19, 1
      %p100 = por %p98, %p99
      %p101 = scmp.ne.s32.totalorder %s92, %s93
      %p102 = scmp.eq.s32.totalorder %s19, 0
      %p103 = por %p101, %p102
      %p104 = scmp.ne.s32.totalorder %s92, %s93
      %p105 = scmp.eq.s32.totalorder %s20, 1
      %p106 = por %p104, %p105
      %p108 = scmp.ne.s32.totalorder %s93, %s107
      %p109 = scmp.eq.s32.totalorder %s20, 0
      %p110 = por %p108, %p109
      %s112 = sadd.s32 %s111, 1
      %p115 = scmp.eq.s32.totalorder %s14, 1
      %p116 = scmp.ne.s32.totalorder %s111, %s113
      %p117 = scmp.eq.s32.totalorder %s14, 0
      %p118 = por %p116, %p117
      %p119 = scmp.ne.s32.totalorder %s111, %s113
      %p120 = scmp.eq.s32.totalorder %s19, 1
      %p121 = por %p119, %p120
      %p122 = scmp.ne.s32.totalorder %s113, %s114
      %p123 = scmp.eq.s32.totalorder %s19, 0
      %p124 = por %p122, %p123
      %p125 = scmp.ne.s32.totalorder %s113, %s114
      %p126 = scmp.eq.s32.totalorder %s20, 1
      %p127 = por %p125, %p126
      %p129 = scmp.ne.s32.totalorder %s114, %s128
      %p130 = scmp.eq.s32.totalorder %s20, 0
      %p131 = por %p129, %p130
      %s132 = ssub.s32 %s14, %s21
      %p133 = scmp.eq.s32.totalorder %s132, 0
      %s135 = sadd.s32 %s134, 1
      %s136 = scalar_select %p133, %s134, %s135
      %p139 = pneg %p133
      %p140 = scmp.eq.s32.totalorder %s14, 1
      %p141 = por %p139, %p140
      %p142 = scmp.ne.s32.totalorder %s134, %s137
      %p143 = scmp.eq.s32.totalorder %s14, 0
      %p144 = por %p142, %p143
      %p145 = scmp.ne.s32.totalorder %s134, %s137
      %p146 = scmp.eq.s32.totalorder %s19, 1
      %p147 = por %p145, %p146
      %p148 = scmp.ne.s32.totalorder %s137, %s138
      %p149 = scmp.eq.s32.totalorder %s19, 0
      %p150 = por %p148, %p149
      %p151 = scmp.ne.s32.totalorder %s137, %s138
      %p152 = scmp.eq.s32.totalorder %s20, 1
      %p153 = por %p151, %p152
      %p155 = scmp.ne.s32.totalorder %s138, %s154
      %p156 = scmp.eq.s32.totalorder %s20, 0
      %p157 = por %p155, %p156
      %p158 = scmp.le.s32.totalorder 1, %s14
      %p159 = scmp.lt.s32.totalorder %s14, 3
      %p160 = pnand %p158, %p159
      %p161 = pneg %p160
      // Predicated region
      $region9: #{bottleneck_forward.1} parent=5 // pred_check
        _
      $region10: #{bottleneck_forward.1} parent=5 // pred_check_branch
        %163 = sbr.rel (%p160) target = $region12
      $region11: #{bottleneck_forward.1} parent=5 // pred_region
        %s164 = ssub.s32 %s14, 1
        // Predicated region
        $region13: #{bottleneck_forward.1} parent=11 // pred_check
          %p165 = pneg %p61
        $region14: #{bottleneck_forward.1} parent=11 // pred_check_branch
          %167 = sbr.rel (%p165) target = $region16
        $region15: #{bottleneck_forward.1} parent=11 // pred_region
          _
        $region16: #{bottleneck_forward.1} parent=11 // pred_fallthru
          _
        // Predicated region
        $region17: #{bottleneck_forward.1} parent=11 // pred_check
          %p168 = pneg %p82
        $region18: #{bottleneck_forward.1} parent=11 // pred_check_branch
          %170 = sbr.rel (%p168) target = $region20
        $region19: #{bottleneck_forward.1} parent=11 // pred_region
          _
        $region20: #{bottleneck_forward.1} parent=11 // pred_fallthru
          _
        // Predicated region
        $region21: #{bottleneck_forward.1} parent=11 // pred_check
          %p171 = pneg %p103
        $region22: #{bottleneck_forward.1} parent=11 // pred_check_branch
          %173 = sbr.rel (%p171) target = $region24
        $region23: #{bottleneck_forward.1} parent=11 // pred_region
          _
        $region24: #{bottleneck_forward.1} parent=11 // pred_fallthru
          _
        // Predicated region
        $region25: #{bottleneck_forward.1} parent=11 // pred_check
          %p174 = pneg %p124
        $region26: #{bottleneck_forward.1} parent=11 // pred_check_branch
          %176 = sbr.rel (%p174) target = $region28
        $region27: #{bottleneck_forward.1} parent=11 // pred_region
          _
        $region28: #{bottleneck_forward.1} parent=11 // pred_fallthru
          _
      $region12: #{bottleneck_forward.1} parent=5 // pred_fallthru
        _
      %p177 = scmp.lt.s32.totalorder %s14, 2
      // Predicated region
      $region29: #{bottleneck_forward.1} parent=5 // pred_check
        %p178 = pneg %p177
      $region30: #{bottleneck_forward.1} parent=5 // pred_check_branch
        %180 = sbr.rel (%p178) target = $region32
      $region31: #{bottleneck_forward.1} parent=5 // pred_region
        // Predicated region
        $region33: #{bottleneck_forward.1} parent=31 // pred_check
          %p181 = pneg %p34
        $region34: #{bottleneck_forward.1} parent=31 // pred_check_branch
          %183 = sbr.rel (%p181) target = $region36
        $region35: #{bottleneck_forward.1} parent=31 // pred_region
          %p184 = scmp.lt.s32.totalorder %s14, 1
          %s185 = scalar_select %p184, %s14, 1
          %s186 = smul.addr %s185, 32
          %s187 = smul.addr %s186, 4
          %s188 = scalar_lea.vmem %s0, %s187
        $region36: #{bottleneck_forward.1} parent=31 // pred_fallthru
          _
      $region32: #{bottleneck_forward.1} parent=5 // pred_fallthru
        _
      %p189 = scmp.le.s32.totalorder 1, %s14
      %p190 = scmp.lt.s32.totalorder %s14, 3
      %p191 = pnand %p189, %p190
      %p192 = pneg %p191
      // Predicated region
      $region37: #{bottleneck_forward.1} parent=5 // pred_check
        _
      $region38: #{bottleneck_forward.1} parent=5 // pred_check_branch
        %194 = sbr.rel (%p191) target = $region40
      $region39: #{bottleneck_forward.1} parent=5 // pred_region
        %s195 = ssub.s32 %s14, 1
        %p196 = scmp.lt.s32.totalorder %s19, 1
        %s197 = scalar_select %p196, %s19, 1
        %s198 = smul.addr %s197, 32
        %s199 = smul.addr %s198, 4
        %s200 = scalar_lea.vmem %s0, %s199
        %p201 = pneg %p40
        %p202 = pneg %p37
        %p203 = pneg %p61
        %p204 = pneg %p58
        %p205 = pneg %p82
        %p206 = pneg %p79
        %p207 = pneg %p103
        %p208 = pneg %p100
        %p209 = pneg %p124
        %p210 = pneg %p121
        %p211 = pneg %p150
        %p212 = pneg %p147
        %s213 = sand.u32 %s137, 1
        %s214 = scalar_lea.sflag [#allocation3], %s213
        %s215 = sand.u32 %s137, 1
        %s216 = smul.addr %s215, 128
        %s217 = scalar_lea.vmem [#allocation2], %s216
        %p218 = scmp.lt.s32.totalorder %s19, 1
        %s219 = scalar_select %p218, %s19, 1
        %s220 = smul.addr %s219, 32
        %s221 = smul.addr %s220, 4
        %s222 = scalar_lea.vmem %s0, %s221
        %v224 = vld [vmem:[%s222] sm:$0xf]
        %v225 = vld [vmem:[%s222 + $0x4] sm:$0xf]
        %v226 = vld [vmem:[%s222 + $0x8] sm:$0xf]
        %v227 = vld [vmem:[%s222 + $0xc] sm:$0xf]
        %v228 = vld [vmem:[%s222 + $0x10] sm:$0xf]
        %v229 = vld [vmem:[%s222 + $0x14] sm:$0xf]
        %v230 = vld [vmem:[%s222 + $0x18] sm:$0xf]
        %v231 = vld [vmem:[%s222 + $0x1c] sm:$0xf]
        %v232 = vld [vmem:[%s222 + $0x20] sm:$0xf]
        %v233 = vld [vmem:[%s222 + $0x24] sm:$0xf]
        %v234 = vld [vmem:[%s222 + $0x28] sm:$0xf]
        %v235 = vld [vmem:[%s222 + $0x2c] sm:$0xf]
        %v236 = vld [vmem:[%s222 + $0x30] sm:$0xf]
        %v237 = vld [vmem:[%s222 + $0x34] sm:$0xf]
        %v238 = vld [vmem:[%s222 + $0x38] sm:$0xf]
        %v239 = vld [vmem:[%s222 + $0x3c] sm:$0xf]
        %v240 = vld [vmem:[%s222 + $0x40] sm:$0xf]
        %v241 = vld [vmem:[%s222 + $0x44] sm:$0xf]
        %v242 = vld [vmem:[%s222 + $0x48] sm:$0xf]
        %v243 = vld [vmem:[%s222 + $0x4c] sm:$0xf]
        %v244 = vld [vmem:[%s222 + $0x50] sm:$0xf]
        %v245 = vld [vmem:[%s222 + $0x54] sm:$0xf]
        %v246 = vld [vmem:[%s222 + $0x58] sm:$0xf]
        %v247 = vld [vmem:[%s222 + $0x5c] sm:$0xf]
        %v248 = vld [vmem:[%s222 + $0x60] sm:$0xf]
        %v249 = vld [vmem:[%s222 + $0x64] sm:$0xf]
        %v250 = vld [vmem:[%s222 + $0x68] sm:$0xf]
        %v251 = vld [vmem:[%s222 + $0x6c] sm:$0xf]
        %v252 = vld [vmem:[%s222 + $0x70] sm:$0xf]
        %v253 = vld [vmem:[%s222 + $0x74] sm:$0xf]
        %v254 = vld [vmem:[%s222 + $0x78] sm:$0xf]
        %v255 = vld [vmem:[%s222 + $0x7c] sm:$0xf]
        %v288 = vunpack.c.l.b16 %v224
        %v289 = vunpack.c.l.b16 %v225
        %v290 = vunpack.c.l.b16 %v226
        %v291 = vunpack.c.l.b16 %v227
        %v292 = vunpack.c.l.b16 %v228
        %v293 = vunpack.c.l.b16 %v229
        %v294 = vunpack.c.l.b16 %v230
        %v295 = vunpack.c.l.b16 %v231
        %v296 = vunpack.c.l.b16 %v232
        %v297 = vunpack.c.l.b16 %v233
        %v298 = vunpack.c.l.b16 %v234
        %v299 = vunpack.c.l.b16 %v235
        %v300 = vunpack.c.l.b16 %v236
        %v301 = vunpack.c.l.b16 %v237
        %v302 = vunpack.c.l.b16 %v238
        %v303 = vunpack.c.l.b16 %v239
        %v304 = vunpack.c.l.b16 %v240
        %v305 = vunpack.c.l.b16 %v241
        %v306 = vunpack.c.l.b16 %v242
        %v307 = vunpack.c.l.b16 %v243
        %v308 = vunpack.c.l.b16 %v244
        %v309 = vunpack.c.l.b16 %v245
        %v310 = vunpack.c.l.b16 %v246
        %v311 = vunpack.c.l.b16 %v247
        %v312 = vunpack.c.l.b16 %v248
        %v313 = vunpack.c.l.b16 %v249
        %v314 = vunpack.c.l.b16 %v250
        %v315 = vunpack.c.l.b16 %v251
        %v316 = vunpack.c.l.b16 %v252
        %v317 = vunpack.c.l.b16 %v253
        %v318 = vunpack.c.l.b16 %v254
        %v319 = vunpack.c.l.b16 %v255
        %v320 = vpack.c.b16 %v289, %v288
        %v321 = vpack.c.b16 %v291, %v290
        %v322 = vpack.c.b16 %v293, %v292
        %v323 = vpack.c.b16 %v295, %v294
        %v324 = vpack.c.b16 %v297, %v296
        %v325 = vpack.c.b16 %v299, %v298
        %v326 = vpack.c.b16 %v301, %v300
        %v327 = vpack.c.b16 %v303, %v302
        %v328 = vpack.c.b16 %v305, %v304
        %v329 = vpack.c.b16 %v307, %v306
        %v330 = vpack.c.b16 %v309, %v308
        %v331 = vpack.c.b16 %v311, %v310
        %v332 = vpack.c.b16 %v313, %v312
        %v333 = vpack.c.b16 %v315, %v314
        %v334 = vpack.c.b16 %v317, %v316
        %v335 = vpack.c.b16 %v319, %v318
        %v337 = vshrl.u32 %v320, 16
        %v339 = vrot.slane %v337, 7
        %v340 = vshll.u32 %v320, 16
        %v342 = vor.u32 %v339, %v340
        %v344 = vshrl.u32 %v321, 16
        %v346 = vrot.slane %v344, 7
        %v347 = vshll.u32 %v321, 16
        %v349 = vor.u32 %v346, %v347
        %v351 = vshrl.u32 %v322, 16
        %v353 = vrot.slane %v351, 7
        %v354 = vshll.u32 %v322, 16
        %v356 = vor.u32 %v353, %v354
        %v358 = vshrl.u32 %v323, 16
        %v360 = vrot.slane %v358, 7
        %v361 = vshll.u32 %v323, 16
        %v363 = vor.u32 %v360, %v361
        %v365 = vshrl.u32 %v324, 16
        %v367 = vrot.slane %v365, 7
        %v368 = vshll.u32 %v324, 16
        %v370 = vor.u32 %v367, %v368
        %v372 = vshrl.u32 %v325, 16
        %v374 = vrot.slane %v372, 7
        %v375 = vshll.u32 %v325, 16
        %v377 = vor.u32 %v374, %v375
        %v379 = vshrl.u32 %v326, 16
        %v381 = vrot.slane %v379, 7
        %v382 = vshll.u32 %v326, 16
        %v384 = vor.u32 %v381, %v382
        %v386 = vshrl.u32 %v327, 16
        %v388 = vrot.slane %v386, 7
        %v389 = vshll.u32 %v327, 16
        %v391 = vor.u32 %v388, %v389
        %v393 = vshrl.u32 %v328, 16
        %v395 = vrot.slane %v393, 7
        %v396 = vshll.u32 %v328, 16
        %v398 = vor.u32 %v395, %v396
        %v400 = vshrl.u32 %v329, 16
        %v402 = vrot.slane %v400, 7
        %v403 = vshll.u32 %v329, 16
        %v405 = vor.u32 %v402, %v403
        %v407 = vshrl.u32 %v330, 16
        %v409 = vrot.slane %v407, 7
        %v410 = vshll.u32 %v330, 16
        %v412 = vor.u32 %v409, %v410
        %v414 = vshrl.u32 %v331, 16
        %v416 = vrot.slane %v414, 7
        %v417 = vshll.u32 %v331, 16
        %v419 = vor.u32 %v416, %v417
        %v421 = vshrl.u32 %v332, 16
        %v423 = vrot.slane %v421, 7
        %v424 = vshll.u32 %v332, 16
        %v426 = vor.u32 %v423, %v424
        %v428 = vshrl.u32 %v333, 16
        %v430 = vrot.slane %v428, 7
        %v431 = vshll.u32 %v333, 16
        %v433 = vor.u32 %v430, %v431
        %v435 = vshrl.u32 %v334, 16
        %v437 = vrot.slane %v435, 7
        %v438 = vshll.u32 %v334, 16
        %v440 = vor.u32 %v437, %v438
        %v442 = vshrl.u32 %v335, 16
        %v444 = vrot.slane %v442, 7
        %v445 = vshll.u32 %v335, 16
        %v447 = vor.u32 %v444, %v445
        %vm480 = vcmask 1040384
        %vm481 = vsmask.f32 256
        %vm482 = vmand %vm480, %vm481
        %v483 = vsel %vm482, 0, %v342
        %v484 = vsel %vm482, 0, %v349
        %v485 = vsel %vm482, 0, %v356
        %v486 = vsel %vm482, 0, %v363
        %v487 = vsel %vm482, 0, %v370
        %v488 = vsel %vm482, 0, %v377
        %v489 = vsel %vm482, 0, %v384
        %v490 = vsel %vm482, 0, %v391
        %v491 = vsel %vm482, 0, %v398
        %v492 = vsel %vm482, 0, %v405
        %v493 = vsel %vm482, 0, %v412
        %v494 = vsel %vm482, 0, %v419
        %v495 = vsel %vm482, 0, %v426
        %v496 = vsel %vm482, 0, %v433
        %v497 = vsel %vm482, 0, %v440
        %v498 = vsel %vm482, 0, %v447
        %v499 = vsel %vm482, %v339, 0
        %v500 = vsel %vm482, %v346, 0
        %v501 = vsel %vm482, %v353, 0
        %v502 = vsel %vm482, %v360, 0
        %v503 = vsel %vm482, %v367, 0
        %v504 = vsel %vm482, %v374, 0
        %v505 = vsel %vm482, %v381, 0
        %v506 = vsel %vm482, %v388, 0
        %v507 = vsel %vm482, %v395, 0
        %v508 = vsel %vm482, %v402, 0
        %v509 = vsel %vm482, %v409, 0
        %v510 = vsel %vm482, %v416, 0
        %v511 = vsel %vm482, %v423, 0
        %v512 = vsel %vm482, %v430, 0
        %v513 = vsel %vm482, %v437, 0
        %v514 = vsel %vm482, %v444, 0
        %vm515 = vsmask.f32 7424
        %v517 = vshrl.u32 0, 16
        %v519 = vshll.u32 0, 16
        %v521 = vrot.slane %v519, 1
        %v522 = vor.u32 %v517, %v521
        %v523 = vsel %vm515, %v522, %v521
        %v525 = vshrl.u32 %v483, 16
        %v527 = vshll.u32 %v483, 16
        %v529 = vrot.slane %v527, 1
        %v530 = vor.u32 %v525, %v529
        %v532 = vshll.u32 %v499, 16
        %v534 = vrot.slane %v532, 1
        %v535 = vsel %vm515, %v530, %v534
        %v537 = vshrl.u32 %v484, 16
        %v539 = vshll.u32 %v484, 16
        %v541 = vrot.slane %v539, 1
        %v542 = vor.u32 %v537, %v541
        %v544 = vshll.u32 %v500, 16
        %v546 = vrot.slane %v544, 1
        %v547 = vsel %vm515, %v542, %v546
        %v549 = vshrl.u32 %v485, 16
        %v551 = vshll.u32 %v485, 16
        %v553 = vrot.slane %v551, 1
        %v554 = vor.u32 %v549, %v553
        %v556 = vshll.u32 %v501, 16
        %v558 = vrot.slane %v556, 1
        %v559 = vsel %vm515, %v554, %v558
        %v561 = vshrl.u32 %v486, 16
        %v563 = vshll.u32 %v486, 16
        %v565 = vrot.slane %v563, 1
        %v566 = vor.u32 %v561, %v565
        %v568 = vshll.u32 %v502, 16
        %v570 = vrot.slane %v568, 1
        %v571 = vsel %vm515, %v566, %v570
        %v573 = vshrl.u32 %v487, 16
        %v575 = vshll.u32 %v487, 16
        %v577 = vrot.slane %v575, 1
        %v578 = vor.u32 %v573, %v577
        %v580 = vshll.u32 %v503, 16
        %v582 = vrot.slane %v580, 1
        %v583 = vsel %vm515, %v578, %v582
        %v585 = vshrl.u32 %v488, 16
        %v587 = vshll.u32 %v488, 16
        %v589 = vrot.slane %v587, 1
        %v590 = vor.u32 %v585, %v589
        %v592 = vshll.u32 %v504, 16
        %v594 = vrot.slane %v592, 1
        %v595 = vsel %vm515, %v590, %v594
        %v597 = vshrl.u32 %v489, 16
        %v599 = vshll.u32 %v489, 16
        %v601 = vrot.slane %v599, 1
        %v602 = vor.u32 %v597, %v601
        %v604 = vshll.u32 %v505, 16
        %v606 = vrot.slane %v604, 1
        %v607 = vsel %vm515, %v602, %v606
        %v609 = vshrl.u32 %v490, 16
        %v611 = vshll.u32 %v490, 16
        %v613 = vrot.slane %v611, 1
        %v614 = vor.u32 %v609, %v613
        %v616 = vshll.u32 %v506, 16
        %v618 = vrot.slane %v616, 1
        %v619 = vsel %vm515, %v614, %v618
        %v621 = vshrl.u32 %v491, 16
        %v623 = vshll.u32 %v491, 16
        %v625 = vrot.slane %v623, 1
        %v626 = vor.u32 %v621, %v625
        %v628 = vshll.u32 %v507, 16
        %v630 = vrot.slane %v628, 1
        %v631 = vsel %vm515, %v626, %v630
        %v633 = vshrl.u32 %v492, 16
        %v635 = vshll.u32 %v492, 16
        %v637 = vrot.slane %v635, 1
        %v638 = vor.u32 %v633, %v637
        %v640 = vshll.u32 %v508, 16
        %v642 = vrot.slane %v640, 1
        %v643 = vsel %vm515, %v638, %v642
        %v645 = vshrl.u32 %v493, 16
        %v647 = vshll.u32 %v493, 16
        %v649 = vrot.slane %v647, 1
        %v650 = vor.u32 %v645, %v649
        %v652 = vshll.u32 %v509, 16
        %v654 = vrot.slane %v652, 1
        %v655 = vsel %vm515, %v650, %v654
        %v657 = vshrl.u32 %v494, 16
        %v659 = vshll.u32 %v494, 16
        %v661 = vrot.slane %v659, 1
        %v662 = vor.u32 %v657, %v661
        %v664 = vshll.u32 %v510, 16
        %v666 = vrot.slane %v664, 1
        %v667 = vsel %vm515, %v662, %v666
        %v669 = vshrl.u32 %v495, 16
        %v671 = vshll.u32 %v495, 16
        %v673 = vrot.slane %v671, 1
        %v674 = vor.u32 %v669, %v673
        %v676 = vshll.u32 %v511, 16
        %v678 = vrot.slane %v676, 1
        %v679 = vsel %vm515, %v674, %v678
        %v681 = vshrl.u32 %v496, 16
        %v683 = vshll.u32 %v496, 16
        %v685 = vrot.slane %v683, 1
        %v686 = vor.u32 %v681, %v685
        %v688 = vshll.u32 %v512, 16
        %v690 = vrot.slane %v688, 1
        %v691 = vsel %vm515, %v686, %v690
        %v693 = vshrl.u32 %v497, 16
        %v695 = vshll.u32 %v497, 16
        %v697 = vrot.slane %v695, 1
        %v698 = vor.u32 %v693, %v697
        %v700 = vshll.u32 %v513, 16
        %v702 = vrot.slane %v700, 1
        %v703 = vsel %vm515, %v698, %v702
        %v705 = vshrl.u32 %v498, 16
        %v707 = vshll.u32 %v498, 16
        %v709 = vrot.slane %v707, 1
        %v710 = vor.u32 %v705, %v709
        %v712 = vshll.u32 %v514, 16
        %v714 = vrot.slane %v712, 1
        %v715 = vsel %vm515, %v710, %v714
        %716 = vrot.lane.b32.xlu0 %v523, 4
        %v717 = vpop.permute.xlu0 %716
        %718 = vrot.lane.b32.xlu0 %v535, 4
        %v719 = vpop.permute.xlu0 %718
        %720 = vrot.lane.b32.xlu0 %v547, 4
        %v721 = vpop.permute.xlu0 %720
        %722 = vrot.lane.b32.xlu0 %v559, 4
        %v723 = vpop.permute.xlu0 %722
        %724 = vrot.lane.b32.xlu0 %v571, 4
        %v725 = vpop.permute.xlu0 %724
        %726 = vrot.lane.b32.xlu0 %v583, 4
        %v727 = vpop.permute.xlu0 %726
        %728 = vrot.lane.b32.xlu0 %v595, 4
        %v729 = vpop.permute.xlu0 %728
        %730 = vrot.lane.b32.xlu0 %v607, 4
        %v731 = vpop.permute.xlu0 %730
        %732 = vrot.lane.b32.xlu0 %v619, 4
        %v733 = vpop.permute.xlu0 %732
        %734 = vrot.lane.b32.xlu0 %v631, 4
        %v735 = vpop.permute.xlu0 %734
        %736 = vrot.lane.b32.xlu0 %v643, 4
        %v737 = vpop.permute.xlu0 %736
        %738 = vrot.lane.b32.xlu0 %v655, 4
        %v739 = vpop.permute.xlu0 %738
        %740 = vrot.lane.b32.xlu0 %v667, 4
        %v741 = vpop.permute.xlu0 %740
        %742 = vrot.lane.b32.xlu0 %v679, 4
        %v743 = vpop.permute.xlu0 %742
        %744 = vrot.lane.b32.xlu0 %v691, 4
        %v745 = vpop.permute.xlu0 %744
        %746 = vrot.lane.b32.xlu0 %v703, 4
        %v747 = vpop.permute.xlu0 %746
        %748 = vrot.lane.b32.xlu0 %v715, 4
        %v749 = vpop.permute.xlu0 %748
        %vm783 = vcmask 1046528
        %v784 = vrot.slane 0, 1
        %v785 = vsel %vm783, %v784, %v784
        %v786 = vrot.slane %v483, 1
        %v787 = vrot.slane %v499, 1
        %v788 = vsel %vm783, %v786, %v787
        %v789 = vrot.slane %v484, 1
        %v790 = vrot.slane %v500, 1
        %v791 = vsel %vm783, %v789, %v790
        %v792 = vrot.slane %v485, 1
        %v793 = vrot.slane %v501, 1
        %v794 = vsel %vm783, %v792, %v793
        %v795 = vrot.slane %v486, 1
        %v796 = vrot.slane %v502, 1
        %v797 = vsel %vm783, %v795, %v796
        %v798 = vrot.slane %v487, 1
        %v799 = vrot.slane %v503, 1
        %v800 = vsel %vm783, %v798, %v799
        %v801 = vrot.slane %v488, 1
        %v802 = vrot.slane %v504, 1
        %v803 = vsel %vm783, %v801, %v802
        %v804 = vrot.slane %v489, 1
        %v805 = vrot.slane %v505, 1
        %v806 = vsel %vm783, %v804, %v805
        %v807 = vrot.slane %v490, 1
        %v808 = vrot.slane %v506, 1
        %v809 = vsel %vm783, %v807, %v808
        %v810 = vrot.slane %v491, 1
        %v811 = vrot.slane %v507, 1
        %v812 = vsel %vm783, %v810, %v811
        %v813 = vrot.slane %v492, 1
        %v814 = vrot.slane %v508, 1
        %v815 = vsel %vm783, %v813, %v814
        %v816 = vrot.slane %v493, 1
        %v817 = vrot.slane %v509, 1
        %v818 = vsel %vm783, %v816, %v817
        %v819 = vrot.slane %v494, 1
        %v820 = vrot.slane %v510, 1
        %v821 = vsel %vm783, %v819, %v820
        %v822 = vrot.slane %v495, 1
        %v823 = vrot.slane %v511, 1
        %v824 = vsel %vm783, %v822, %v823
        %v825 = vrot.slane %v496, 1
        %v826 = vrot.slane %v512, 1
        %v827 = vsel %vm783, %v825, %v826
        %v828 = vrot.slane %v497, 1
        %v829 = vrot.slane %v513, 1
        %v830 = vsel %vm783, %v828, %v829
        %v831 = vrot.slane %v498, 1
        %v832 = vrot.slane %v514, 1
        %v833 = vsel %vm783, %v831, %v832
        %834 = vrot.lane.b32.xlu0 %v785, 8
        %v835 = vpop.permute.xlu0 %834
        %836 = vrot.lane.b32.xlu0 %v788, 8
        %v837 = vpop.permute.xlu0 %836
        %838 = vrot.lane.b32.xlu0 %v791, 8
        %v839 = vpop.permute.xlu0 %838
        %840 = vrot.lane.b32.xlu0 %v794, 8
        %v841 = vpop.permute.xlu0 %840
        %842 = vrot.lane.b32.xlu0 %v797, 8
        %v843 = vpop.permute.xlu0 %842
        %844 = vrot.lane.b32.xlu0 %v800, 8
        %v845 = vpop.permute.xlu0 %844
        %846 = vrot.lane.b32.xlu0 %v803, 8
        %v847 = vpop.permute.xlu0 %846
        %848 = vrot.lane.b32.xlu0 %v806, 8
        %v849 = vpop.permute.xlu0 %848
        %850 = vrot.lane.b32.xlu0 %v809, 8
        %v851 = vpop.permute.xlu0 %850
        %852 = vrot.lane.b32.xlu0 %v812, 8
        %v853 = vpop.permute.xlu0 %852
        %854 = vrot.lane.b32.xlu0 %v815, 8
        %v855 = vpop.permute.xlu0 %854
        %856 = vrot.lane.b32.xlu0 %v818, 8
        %v857 = vpop.permute.xlu0 %856
        %858 = vrot.lane.b32.xlu0 %v821, 8
        %v859 = vpop.permute.xlu0 %858
        %860 = vrot.lane.b32.xlu0 %v824, 8
        %v861 = vpop.permute.xlu0 %860
        %862 = vrot.lane.b32.xlu0 %v827, 8
        %v863 = vpop.permute.xlu0 %862
        %864 = vrot.lane.b32.xlu0 %v830, 8
        %v865 = vpop.permute.xlu0 %864
        %866 = vrot.lane.b32.xlu0 %v833, 8
        %v867 = vpop.permute.xlu0 %866
        %vm868 = vcmask 31744
        %v870 = vsel %vm868, 0, %v717
        %v872 = vsel %vm868, %v483, %v719
        %v874 = vsel %vm868, %v484, %v721
        %v876 = vsel %vm868, %v485, %v723
        %v878 = vsel %vm868, %v486, %v725
        %v880 = vsel %vm868, %v487, %v727
        %v882 = vsel %vm868, %v488, %v729
        %v884 = vsel %vm868, %v489, %v731
        %v886 = vsel %vm868, %v490, %v733
        %v888 = vsel %vm868, %v491, %v735
        %v890 = vsel %vm868, %v492, %v737
        %v892 = vsel %vm868, %v493, %v739
        %v894 = vsel %vm868, %v494, %v741
        %v896 = vsel %vm868, %v495, %v743
        %v898 = vsel %vm868, %v496, %v745
        %v900 = vsel %vm868, %v497, %v747
        %v902 = vsel %vm868, %v498, %v749
        %vm903 = vcmask 64512
        %v905 = vsel %vm903, %v870, %v835
        %v907 = vsel %vm903, %v872, %v837
        %v909 = vsel %vm903, %v874, %v839
        %v911 = vsel %vm903, %v876, %v841
        %v913 = vsel %vm903, %v878, %v843
        %v915 = vsel %vm903, %v880, %v845
        %v917 = vsel %vm903, %v882, %v847
        %v919 = vsel %vm903, %v884, %v849
        %v921 = vsel %vm903, %v886, %v851
        %v923 = vsel %vm903, %v888, %v853
        %v925 = vsel %vm903, %v890, %v855
        %v927 = vsel %vm903, %v892, %v857
        %v929 = vsel %vm903, %v894, %v859
        %v931 = vsel %vm903, %v896, %v861
        %v933 = vsel %vm903, %v898, %v863
        %v935 = vsel %vm903, %v900, %v865
        %v937 = vsel %vm903, %v902, %v867
        %v938 = vld [vmem:[%s1] sm:$0xf]
        %v939 = vld [vmem:[%s1 + $0x4] sm:$0x3]
        %s940 = scalar_lea.vmem %s1, 8
        %v941 = vld [vmem:[%s940] sm:$0xf]
        %v942 = vld [vmem:[%s940 + $0x4] sm:$0x3]
        %v945 = vunpack.c.l.b16 %v941
        %v946 = vunpack.c.l.b16 %v942
        %v947 = vpack.c.b16 %v946, %v945
        %vm948 = vcmask 97280
        %v949 = vsel %vm948, %v907, 0
        %v951 = vsel %vm948, %v909, 0
        %v953 = vsel %vm948, %v911, 0
        %v955 = vsel %vm948, %v913, 0
        %v957 = vsel %vm948, %v915, 0
        %v959 = vsel %vm948, %v917, 0
        %v961 = vsel %vm948, %v919, 0
        %v963 = vsel %vm948, %v921, 0
        %v965 = vsel %vm948, %v923, 0
        %v967 = vsel %vm948, %v925, 0
        %v969 = vsel %vm948, %v927, 0
        %v971 = vsel %vm948, %v929, 0
        %v973 = vsel %vm948, %v931, 0
        %v975 = vsel %vm948, %v933, 0
        %v977 = vsel %vm948, %v935, 0
        %v979 = vsel %vm948, %v937, 0
        %vm981 = vcmask 1045504
        %v983 = vsel %vm981, %v947, 0
        %985 = vmatprep.subr.bf16.mxu0 0
        %986 = vmatpush1.bf16.msra.mxu0 %v983
        %987 = vmatprep.subr.bf16.mxu0 0
        %988 = vmatpush1.bf16.msra.mxu0 0
        %989 = vmatprep.subr.bf16.mxu0 0
        %990 = vmatpush1.bf16.msra.mxu0 0
        %991 = vmatprep.subr.bf16.mxu0 0
        %992 = vmatpush1.bf16.msra.mxu0 0
        %993 = vmatprep.subr.bf16.mxu0 0
        %994 = vmatpush1.bf16.msra.mxu0 0
        %995 = vmatprep.subr.bf16.mxu0 0
        %996 = vmatpush1.bf16.msra.mxu0 0
        %997 = vmatprep.subr.bf16.mxu0 0
        %998 = vmatpush1.bf16.msra.mxu0 0
        %999 = vmatprep.subr.bf16.mxu0 0
        %1000 = vmatpush1.bf16.msra.mxu0 0
        %1001 = vmatprep.subr.bf16.mxu0 0
        %1002 = vmatpush1.bf16.msra.mxu0 0
        %1003 = vmatprep.subr.bf16.mxu0 0
        %1004 = vmatpush1.bf16.msra.mxu0 0
        %1005 = vmatprep.subr.bf16.mxu0 0
        %1006 = vmatpush1.bf16.msra.mxu0 0
        %1007 = vmatprep.subr.bf16.mxu0 0
        %1008 = vmatpush1.bf16.msra.mxu0 0
        %1009 = vmatprep.subr.bf16.mxu0 0
        %1010 = vmatpush1.bf16.msra.mxu0 0
        %1011 = vmatprep.subr.bf16.mxu0 0
        %1012 = vmatpush1.bf16.msra.mxu0 0
        %1013 = vmatprep.subr.bf16.mxu0 0
        %1014 = vmatpush1.bf16.msra.mxu0 0
        %1015 = vmatprep.subr.bf16.mxu0 0
        %1016 = vmatpush1.bf16.msra.mxu0 0
        %1017 = vmatprep.mubr.bf16.mxu0 0
        %1018 = vmatmul.mubr.bf16.gmra.mrb[0].mxu0 %v949
        %v1019 = vpop.f32.mrb[0].mxu0
        %v1020 = vadd.f32 0.0, %v1019
        %v1021 = vpop.f32.mrb[0].mxu0
        %v1022 = vpop.f32.mrb[0].mxu0
        %v1023 = vadd.f32 0.0, %v1022
        %v1024 = vpop.f32.mrb[0].mxu0
        %1025 = vmatprep.mubr.bf16.mxu0 0
        %1026 = vmatmul.mubr.bf16.gmra.mrb[0].mxu0 %v951
        %v1027 = vpop.f32.mrb[0].mxu0
        %v1028 = vadd.f32 0.0, %v1027
        %v1029 = vpop.f32.mrb[0].mxu0
        %v1030 = vpop.f32.mrb[0].mxu0
        %v1031 = vadd.f32 0.0, %v1030
        %v1032 = vpop.f32.mrb[0].mxu0
        %1033 = vmatprep.mubr.bf16.mxu0 0
        %1034 = vmatmul.mubr.bf16.gmra.mrb[0].mxu0 %v953
        %v1035 = vpop.f32.mrb[0].mxu0
        %v1036 = vadd.f32 0.0, %v1035
        %v1037 = vpop.f32.mrb[0].mxu0
        %v1038 = vpop.f32.mrb[0].mxu0
        %v1039 = vadd.f32 0.0, %v1038
        %v1040 = vpop.f32.mrb[0].mxu0
        %1041 = vmatprep.mubr.bf16.mxu0 0
        %1042 = vmatmul.mubr.bf16.gmra.mrb[0].mxu0 %v955
        %v1043 = vpop.f32.mrb[0].mxu0
        %v1044 = vadd.f32 0.0, %v1043
        %v1045 = vpop.f32.mrb[0].mxu0
        %v1046 = vpop.f32.mrb[0].mxu0
        %v1047 = vadd.f32 0.0, %v1046
        %v1048 = vpop.f32.mrb[0].mxu0
        %1049 = vmatprep.mubr.bf16.mxu0 0
        %1050 = vmatmul.mubr.bf16.gmra.mrb[0].mxu0 %v957
        %v1051 = vpop.f32.mrb[0].mxu0
        %v1052 = vadd.f32 0.0, %v1051
        %v1053 = vpop.f32.mrb[0].mxu0
        %v1054 = vpop.f32.mrb[0].mxu0
        %v1055 = vadd.f32 0.0, %v1054
        %v1056 = vpop.f32.mrb[0].mxu0
        %1057 = vmatprep.mubr.bf16.mxu0 0
        %1058 = vmatmul.mubr.bf16.gmra.mrb[0].mxu0 %v959
        %v1059 = vpop.f32.mrb[0].mxu0
        %v1060 = vadd.f32 0.0, %v1059
        %v1061 = vpop.f32.mrb[0].mxu0
        %v1062 = vpop.f32.mrb[0].mxu0
        %v1063 = vadd.f32 0.0, %v1062
        %v1064 = vpop.f32.mrb[0].mxu0
        %1065 = vmatprep.mubr.bf16.mxu0 0
        %1066 = vmatmul.mubr.bf16.gmra.mrb[0].mxu0 %v961
        %v1067 = vpop.f32.mrb[0].mxu0
        %v1068 = vadd.f32 0.0, %v1067
        %v1069 = vpop.f32.mrb[0].mxu0
        %v1070 = vpop.f32.mrb[0].mxu0
        %v1071 = vadd.f32 0.0, %v1070
        %v1072 = vpop.f32.mrb[0].mxu0
        %1073 = vmatprep.mubr.bf16.mxu0 0
        %1074 = vmatmul.mubr.bf16.gmra.mrb[0].mxu0 %v963
        %v1075 = vpop.f32.mrb[0].mxu0
        %v1076 = vadd.f32 0.0, %v1075
        %v1077 = vpop.f32.mrb[0].mxu0
        %v1078 = vpop.f32.mrb[0].mxu0
        %v1079 = vadd.f32 0.0, %v1078
        %v1080 = vpop.f32.mrb[0].mxu0
        %1081 = vmatprep.mubr.bf16.mxu0 0
        %1082 = vmatmul.mubr.bf16.gmra.mrb[0].mxu0 %v965
        %v1083 = vpop.f32.mrb[0].mxu0
        %v1084 = vadd.f32 0.0, %v1083
        %v1085 = vpop.f32.mrb[0].mxu0
        %v1086 = vpop.f32.mrb[0].mxu0
        %v1087 = vadd.f32 0.0, %v1086
        %v1088 = vpop.f32.mrb[0].mxu0
        %1089 = vmatprep.mubr.bf16.mxu0 0
        %1090 = vmatmul.mubr.bf16.gmra.mrb[0].mxu0 %v967
        %v1091 = vpop.f32.mrb[0].mxu0
        %v1092 = vadd.f32 0.0, %v1091
        %v1093 = vpop.f32.mrb[0].mxu0
        %v1094 = vpop.f32.mrb[0].mxu0
        %v1095 = vadd.f32 0.0, %v1094
        %v1096 = vpop.f32.mrb[0].mxu0
        %1097 = vmatprep.mubr.bf16.mxu0 0
        %1098 = vmatmul.mubr.bf16.gmra.mrb[0].mxu0 %v969
        %v1099 = vpop.f32.mrb[0].mxu0
        %v1100 = vadd.f32 0.0, %v1099
        %v1101 = vpop.f32.mrb[0].mxu0
        %v1102 = vpop.f32.mrb[0].mxu0
        %v1103 = vadd.f32 0.0, %v1102
        %v1104 = vpop.f32.mrb[0].mxu0
        %1105 = vmatprep.mubr.bf16.mxu0 0
        %1106 = vmatmul.mubr.bf16.gmra.mrb[0].mxu0 %v971
        %v1107 = vpop.f32.mrb[0].mxu0
        %v1108 = vadd.f32 0.0, %v1107
        %v1109 = vpop.f32.mrb[0].mxu0
        %v1110 = vpop.f32.mrb[0].mxu0
        %v1111 = vadd.f32 0.0, %v1110
        %v1112 = vpop.f32.mrb[0].mxu0
        %1113 = vmatprep.mubr.bf16.mxu0 0
        %1114 = vmatmul.mubr.bf16.gmra.mrb[0].mxu0 %v973
        %v1115 = vpop.f32.mrb[0].mxu0
        %v1116 = vadd.f32 0.0, %v1115
        %v1117 = vpop.f32.mrb[0].mxu0
        %v1118 = vpop.f32.mrb[0].mxu0
        %v1119 = vadd.f32 0.0, %v1118
        %v1120 = vpop.f32.mrb[0].mxu0
        %1121 = vmatprep.mubr.bf16.mxu0 0
        %1122 = vmatmul.mubr.bf16.gmra.mrb[0].mxu0 %v975
        %v1123 = vpop.f32.mrb[0].mxu0
        %v1124 = vadd.f32 0.0, %v1123
        %v1125 = vpop.f32.mrb[0].mxu0
        %v1126 = vpop.f32.mrb[0].mxu0
        %v1127 = vadd.f32 0.0, %v1126
        %v1128 = vpop.f32.mrb[0].mxu0
        %1129 = vmatprep.mubr.bf16.mxu0 0
        %1130 = vmatmul.mubr.bf16.gmra.mrb[0].mxu0 %v977
        %v1131 = vpop.f32.mrb[0].mxu0
        %v1132 = vadd.f32 0.0, %v1131
        %v1133 = vpop.f32.mrb[0].mxu0
        %v1134 = vpop.f32.mrb[0].mxu0
        %v1135 = vadd.f32 0.0, %v1134
        %v1136 = vpop.f32.mrb[0].mxu0
        %1137 = vmatprep.mubr.bf16.mxu0 0
        %1138 = vmatmul.mubr.bf16.gmra.mrb[0].mxu0 %v979
        %v1139 = vpop.f32.mrb[0].mxu0
        %v1140 = vadd.f32 0.0, %v1139
        %v1141 = vpop.f32.mrb[0].mxu0
        %v1142 = vpop.f32.mrb[0].mxu0
        %v1143 = vadd.f32 0.0, %v1142
        %v1144 = vpop.f32.mrb[0].mxu0
        %1145 = vdwg.mxu0
        %v1148 = vunpack.c.l.b16 %v938
        %v1149 = vunpack.c.l.b16 %v939
        %v1150 = vpack.c.b16 %v1149, %v1148
        %v1151 = vsel %vm948, %v905, 0
        %v1154 = vsel %vm981, %v1150, 0
        %1156 = vmatprep.subr.bf16.mxu0 0
        %1157 = vmatpush1.bf16.msra.mxu0 %v1154
        %1158 = vmatprep.subr.bf16.mxu0 0
        %1159 = vmatpush1.bf16.msra.mxu0 0
        %1160 = vmatprep.subr.bf16.mxu0 0
        %1161 = vmatpush1.bf16.msra.mxu0 0
        %1162 = vmatprep.subr.bf16.mxu0 0
        %1163 = vmatpush1.bf16.msra.mxu0 0
        %1164 = vmatprep.subr.bf16.mxu0 0
        %1165 = vmatpush1.bf16.msra.mxu0 0
        %1166 = vmatprep.subr.bf16.mxu0 0
        %1167 = vmatpush1.bf16.msra.mxu0 0
        %1168 = vmatprep.subr.bf16.mxu0 0
        %1169 = vmatpush1.bf16.msra.mxu0 0
        %1170 = vmatprep.subr.bf16.mxu0 0
        %1171 = vmatpush1.bf16.msra.mxu0 0
        %1172 = vmatprep.subr.bf16.mxu0 0
        %1173 = vmatpush1.bf16.msra.mxu0 0
        %1174 = vmatprep.subr.bf16.mxu0 0
        %1175 = vmatpush1.bf16.msra.mxu0 0
        %1176 = vmatprep.subr.bf16.mxu0 0
        %1177 = vmatpush1.bf16.msra.mxu0 0
        %1178 = vmatprep.subr.bf16.mxu0 0
        %1179 = vmatpush1.bf16.msra.mxu0 0
        %1180 = vmatprep.subr.bf16.mxu0 0
        %1181 = vmatpush1.bf16.msra.mxu0 0
        %1182 = vmatprep.subr.bf16.mxu0 0
        %1183 = vmatpush1.bf16.msra.mxu0 0
        %1184 = vmatprep.subr.bf16.mxu0 0
        %1185 = vmatpush1.bf16.msra.mxu0 0
        %1186 = vmatprep.subr.bf16.mxu0 0
        %1187 = vmatpush1.bf16.msra.mxu0 0
        %1188 = vmatprep.mubr.bf16.mxu0 0
        %1189 = vmatmul.mubr.bf16.gmra.mrb[0].mxu0 %v1151
        %v1190 = vpop.f32.mrb[0].mxu0
        %v1191 = vadd.f32 %v1020, %v1190
        %v1192 = vpop.f32.mrb[0].mxu0
        %v1193 = vpop.f32.mrb[0].mxu0
        %v1194 = vadd.f32 %v1023, %v1193
        %v1195 = vpop.f32.mrb[0].mxu0
        %1196 = vmatprep.mubr.bf16.mxu0 0
        %1197 = vmatmul.mubr.bf16.gmra.mrb[0].mxu0 %v949
        %v1198 = vpop.f32.mrb[0].mxu0
        %v1199 = vadd.f32 %v1028, %v1198
        %v1200 = vpop.f32.mrb[0].mxu0
        %v1201 = vpop.f32.mrb[0].mxu0
        %v1202 = vadd.f32 %v1031, %v1201
        %v1203 = vpop.f32.mrb[0].mxu0
        %1204 = vmatprep.mubr.bf16.mxu0 0
        %1205 = vmatmul.mubr.bf16.gmra.mrb[0].mxu0 %v951
        %v1206 = vpop.f32.mrb[0].mxu0
        %v1207 = vadd.f32 %v1036, %v1206
        %v1208 = vpop.f32.mrb[0].mxu0
        %v1209 = vpop.f32.mrb[0].mxu0
        %v1210 = vadd.f32 %v1039, %v1209
        %v1211 = vpop.f32.mrb[0].mxu0
        %1212 = vmatprep.mubr.bf16.mxu0 0
        %1213 = vmatmul.mubr.bf16.gmra.mrb[0].mxu0 %v953
        %v1214 = vpop.f32.mrb[0].mxu0
        %v1215 = vadd.f32 %v1044, %v1214
        %v1216 = vpop.f32.mrb[0].mxu0
        %v1217 = vpop.f32.mrb[0].mxu0
        %v1218 = vadd.f32 %v1047, %v1217
        %v1219 = vpop.f32.mrb[0].mxu0
        %1220 = vmatprep.mubr.bf16.mxu0 0
        %1221 = vmatmul.mubr.bf16.gmra.mrb[0].mxu0 %v955
        %v1222 = vpop.f32.mrb[0].mxu0
        %v1223 = vadd.f32 %v1052, %v1222
        %v1224 = vpop.f32.mrb[0].mxu0
        %v1225 = vpop.f32.mrb[0].mxu0
        %v1226 = vadd.f32 %v1055, %v1225
        %v1227 = vpop.f32.mrb[0].mxu0
        %1228 = vmatprep.mubr.bf16.mxu0 0
        %1229 = vmatmul.mubr.bf16.gmra.mrb[0].mxu0 %v957
        %v1230 = vpop.f32.mrb[0].mxu0
        %v1231 = vadd.f32 %v1060, %v1230
        %v1232 = vpop.f32.mrb[0].mxu0
        %v1233 = vpop.f32.mrb[0].mxu0
        %v1234 = vadd.f32 %v1063, %v1233
        %v1235 = vpop.f32.mrb[0].mxu0
        %1236 = vmatprep.mubr.bf16.mxu0 0
        %1237 = vmatmul.mubr.bf16.gmra.mrb[0].mxu0 %v959
        %v1238 = vpop.f32.mrb[0].mxu0
        %v1239 = vadd.f32 %v1068, %v1238
        %v1240 = vpop.f32.mrb[0].mxu0
        %v1241 = vpop.f32.mrb[0].mxu0
        %v1242 = vadd.f32 %v1071, %v1241
        %v1243 = vpop.f32.mrb[0].mxu0
        %1244 = vmatprep.mubr.bf16.mxu0 0
        %1245 = vmatmul.mubr.bf16.gmra.mrb[0].mxu0 %v961
        %v1246 = vpop.f32.mrb[0].mxu0
        %v1247 = vadd.f32 %v1076, %v1246
        %v1248 = vpop.f32.mrb[0].mxu0
        %v1249 = vpop.f32.mrb[0].mxu0
        %v1250 = vadd.f32 %v1079, %v1249
        %v1251 = vpop.f32.mrb[0].mxu0
        %1252 = vmatprep.mubr.bf16.mxu0 0
        %1253 = vmatmul.mubr.bf16.gmra.mrb[0].mxu0 %v963
        %v1254 = vpop.f32.mrb[0].mxu0
        %v1255 = vadd.f32 %v1084, %v1254
        %v1256 = vpop.f32.mrb[0].mxu0
        %v1257 = vpop.f32.mrb[0].mxu0
        %v1258 = vadd.f32 %v1087, %v1257
        %v1259 = vpop.f32.mrb[0].mxu0
        %1260 = vmatprep.mubr.bf16.mxu0 0
        %1261 = vmatmul.mubr.bf16.gmra.mrb[0].mxu0 %v965
        %v1262 = vpop.f32.mrb[0].mxu0
        %v1263 = vadd.f32 %v1092, %v1262
        %v1264 = vpop.f32.mrb[0].mxu0
        %v1265 = vpop.f32.mrb[0].mxu0
        %v1266 = vadd.f32 %v1095, %v1265
        %v1267 = vpop.f32.mrb[0].mxu0
        %1268 = vmatprep.mubr.bf16.mxu0 0
        %1269 = vmatmul.mubr.bf16.gmra.mrb[0].mxu0 %v967
        %v1270 = vpop.f32.mrb[0].mxu0
        %v1271 = vadd.f32 %v1100, %v1270
        %v1272 = vpop.f32.mrb[0].mxu0
        %v1273 = vpop.f32.mrb[0].mxu0
        %v1274 = vadd.f32 %v1103, %v1273
        %v1275 = vpop.f32.mrb[0].mxu0
        %1276 = vmatprep.mubr.bf16.mxu0 0
        %1277 = vmatmul.mubr.bf16.gmra.mrb[0].mxu0 %v969
        %v1278 = vpop.f32.mrb[0].mxu0
        %v1279 = vadd.f32 %v1108, %v1278
        %v1280 = vpop.f32.mrb[0].mxu0
        %v1281 = vpop.f32.mrb[0].mxu0
        %v1282 = vadd.f32 %v1111, %v1281
        %v1283 = vpop.f32.mrb[0].mxu0
        %1284 = vmatprep.mubr.bf16.mxu0 0
        %1285 = vmatmul.mubr.bf16.gmra.mrb[0].mxu0 %v971
        %v1286 = vpop.f32.mrb[0].mxu0
        %v1287 = vadd.f32 %v1116, %v1286
        %v1288 = vpop.f32.mrb[0].mxu0
        %v1289 = vpop.f32.mrb[0].mxu0
        %v1290 = vadd.f32 %v1119, %v1289
        %v1291 = vpop.f32.mrb[0].mxu0
        %1292 = vmatprep.mubr.bf16.mxu0 0
        %1293 = vmatmul.mubr.bf16.gmra.mrb[0].mxu0 %v973
        %v1294 = vpop.f32.mrb[0].mxu0
        %v1295 = vadd.f32 %v1124, %v1294
        %v1296 = vpop.f32.mrb[0].mxu0
        %v1297 = vpop.f32.mrb[0].mxu0
        %v1298 = vadd.f32 %v1127, %v1297
        %v1299 = vpop.f32.mrb[0].mxu0
        %1300 = vmatprep.mubr.bf16.mxu0 0
        %1301 = vmatmul.mubr.bf16.gmra.mrb[0].mxu0 %v975
        %v1302 = vpop.f32.mrb[0].mxu0
        %v1303 = vadd.f32 %v1132, %v1302
        %v1304 = vpop.f32.mrb[0].mxu0
        %v1305 = vpop.f32.mrb[0].mxu0
        %v1306 = vadd.f32 %v1135, %v1305
        %v1307 = vpop.f32.mrb[0].mxu0
        %1308 = vmatprep.mubr.bf16.mxu0 0
        %1309 = vmatmul.mubr.bf16.gmra.mrb[0].mxu0 %v977
        %v1310 = vpop.f32.mrb[0].mxu0
        %v1311 = vadd.f32 %v1140, %v1310
        %v1312 = vpop.f32.mrb[0].mxu0
        %v1313 = vpop.f32.mrb[0].mxu0
        %v1314 = vadd.f32 %v1143, %v1313
        %v1315 = vpop.f32.mrb[0].mxu0
        %1316 = vdwg.mxu0
        %s1317 = scalar_lea.vmem %s1, 16
        %v1318 = vld [vmem:[%s1317] sm:$0xf]
        %v1319 = vld [vmem:[%s1317 + $0x4] sm:$0x3]
        %v1322 = vunpack.c.l.b16 %v1318
        %v1323 = vunpack.c.l.b16 %v1319
        %v1324 = vpack.c.b16 %v1323, %v1322
        %v1326 = vsel %vm981, %v1324, 0
        %1328 = vmatprep.subr.bf16.mxu0 0
        %1329 = vmatpush1.bf16.msra.mxu0 %v1326
        %1330 = vmatprep.subr.bf16.mxu0 0
        %1331 = vmatpush1.bf16.msra.mxu0 0
        %1332 = vmatprep.subr.bf16.mxu0 0
        %1333 = vmatpush1.bf16.msra.mxu0 0
        %1334 = vmatprep.subr.bf16.mxu0 0
        %1335 = vmatpush1.bf16.msra.mxu0 0
        %1336 = vmatprep.subr.bf16.mxu0 0
        %1337 = vmatpush1.bf16.msra.mxu0 0
        %1338 = vmatprep.subr.bf16.mxu0 0
        %1339 = vmatpush1.bf16.msra.mxu0 0
        %1340 = vmatprep.subr.bf16.mxu0 0
        %1341 = vmatpush1.bf16.msra.mxu0 0
        %1342 = vmatprep.subr.bf16.mxu0 0
        %1343 = vmatpush1.bf16.msra.mxu0 0
        %1344 = vmatprep.subr.bf16.mxu0 0
        %1345 = vmatpush1.bf16.msra.mxu0 0
        %1346 = vmatprep.subr.bf16.mxu0 0
        %1347 = vmatpush1.bf16.msra.mxu0 0
        %1348 = vmatprep.subr.bf16.mxu0 0
        %1349 = vmatpush1.bf16.msra.mxu0 0
        %1350 = vmatprep.subr.bf16.mxu0 0
        %1351 = vmatpush1.bf16.msra.mxu0 0
        %1352 = vmatprep.subr.bf16.mxu0 0
        %1353 = vmatpush1.bf16.msra.mxu0 0
        %1354 = vmatprep.subr.bf16.mxu0 0
        %1355 = vmatpush1.bf16.msra.mxu0 0
        %1356 = vmatprep.subr.bf16.mxu0 0
        %1357 = vmatpush1.bf16.msra.mxu0 0
        %1358 = vmatprep.subr.bf16.mxu0 0
        %1359 = vmatpush1.bf16.msra.mxu0 0
        %1360 = vmatprep.mubr.bf16.mxu0 0
        %1361 = vmatmul.mubr.bf16.gmra.mrb[0].mxu0 %v951
        %v1362 = vpop.f32.mrb[0].mxu0
        %v1363 = vadd.f32 0.0, %v1362
        %v1364 = vpop.f32.mrb[0].mxu0
        %v1365 = vpop.f32.mrb[0].mxu0
        %v1366 = vadd.f32 0.0, %v1365
        %v1367 = vpop.f32.mrb[0].mxu0
        %1368 = vmatprep.mubr.bf16.mxu0 0
        %1369 = vmatmul.mubr.bf16.gmra.mrb[0].mxu0 %v953
        %v1370 = vpop.f32.mrb[0].mxu0
        %v1371 = vadd.f32 0.0, %v1370
        %v1372 = vpop.f32.mrb[0].mxu0
        %v1373 = vpop.f32.mrb[0].mxu0
        %v1374 = vadd.f32 0.0, %v1373
        %v1375 = vpop.f32.mrb[0].mxu0
        %1376 = vmatprep.mubr.bf16.mxu0 0
        %1377 = vmatmul.mubr.bf16.gmra.mrb[0].mxu0 %v955
        %v1378 = vpop.f32.mrb[0].mxu0
        %v1379 = vadd.f32 0.0, %v1378
        %v1380 = vpop.f32.mrb[0].mxu0
        %v1381 = vpop.f32.mrb[0].mxu0
        %v1382 = vadd.f32 0.0, %v1381
        %v1383 = vpop.f32.mrb[0].mxu0
        %1384 = vmatprep.mubr.bf16.mxu0 0
        %1385 = vmatmul.mubr.bf16.gmra.mrb[0].mxu0 %v957
        %v1386 = vpop.f32.mrb[0].mxu0
        %v1387 = vadd.f32 0.0, %v1386
        %v1388 = vpop.f32.mrb[0].mxu0
        %v1389 = vpop.f32.mrb[0].mxu0
        %v1390 = vadd.f32 0.0, %v1389
        %v1391 = vpop.f32.mrb[0].mxu0
        %1392 = vmatprep.mubr.bf16.mxu0 0
        %1393 = vmatmul.mubr.bf16.gmra.mrb[0].mxu0 %v959
        %v1394 = vpop.f32.mrb[0].mxu0
        %v1395 = vadd.f32 0.0, %v1394
        %v1396 = vpop.f32.mrb[0].mxu0
        %v1397 = vpop.f32.mrb[0].mxu0
        %v1398 = vadd.f32 0.0, %v1397
        %v1399 = vpop.f32.mrb[0].mxu0
        %1400 = vmatprep.mubr.bf16.mxu0 0
        %1401 = vmatmul.mubr.bf16.gmra.mrb[0].mxu0 %v961
        %v1402 = vpop.f32.mrb[0].mxu0
        %v1403 = vadd.f32 0.0, %v1402
        %v1404 = vpop.f32.mrb[0].mxu0
        %v1405 = vpop.f32.mrb[0].mxu0
        %v1406 = vadd.f32 0.0, %v1405
        %v1407 = vpop.f32.mrb[0].mxu0
        %1408 = vmatprep.mubr.bf16.mxu0 0
        %1409 = vmatmul.mubr.bf16.gmra.mrb[0].mxu0 %v963
        %v1410 = vpop.f32.mrb[0].mxu0
        %v1411 = vadd.f32 0.0, %v1410
        %v1412 = vpop.f32.mrb[0].mxu0
        %v1413 = vpop.f32.mrb[0].mxu0
        %v1414 = vadd.f32 0.0, %v1413
        %v1415 = vpop.f32.mrb[0].mxu0
        %1416 = vmatprep.mubr.bf16.mxu0 0
        %1417 = vmatmul.mubr.bf16.gmra.mrb[0].mxu0 %v965
        %v1418 = vpop.f32.mrb[0].mxu0
        %v1419 = vadd.f32 0.0, %v1418
        %v1420 = vpop.f32.mrb[0].mxu0
        %v1421 = vpop.f32.mrb[0].mxu0
        %v1422 = vadd.f32 0.0, %v1421
        %v1423 = vpop.f32.mrb[0].mxu0
        %1424 = vmatprep.mubr.bf16.mxu0 0
        %1425 = vmatmul.mubr.bf16.gmra.mrb[0].mxu0 %v967
        %v1426 = vpop.f32.mrb[0].mxu0
        %v1427 = vadd.f32 0.0, %v1426
        %v1428 = vpop.f32.mrb[0].mxu0
        %v1429 = vpop.f32.mrb[0].mxu0
        %v1430 = vadd.f32 0.0, %v1429
        %v1431 = vpop.f32.mrb[0].mxu0
        %1432 = vmatprep.mubr.bf16.mxu0 0
        %1433 = vmatmul.mubr.bf16.gmra.mrb[0].mxu0 %v969
        %v1434 = vpop.f32.mrb[0].mxu0
        %v1435 = vadd.f32 0.0, %v1434
        %v1436 = vpop.f32.mrb[0].mxu0
        %v1437 = vpop.f32.mrb[0].mxu0
        %v1438 = vadd.f32 0.0, %v1437
        %v1439 = vpop.f32.mrb[0].mxu0
        %1440 = vmatprep.mubr.bf16.mxu0 0
        %1441 = vmatmul.mubr.bf16.gmra.mrb[0].mxu0 %v971
        %v1442 = vpop.f32.mrb[0].mxu0
        %v1443 = vadd.f32 0.0, %v1442
        %v1444 = vpop.f32.mrb[0].mxu0
        %v1445 = vpop.f32.mrb[0].mxu0
        %v1446 = vadd.f32 0.0, %v1445
        %v1447 = vpop.f32.mrb[0].mxu0
        %1448 = vmatprep.mubr.bf16.mxu0 0
        %1449 = vmatmul.mubr.bf16.gmra.mrb[0].mxu0 %v973
        %v1450 = vpop.f32.mrb[0].mxu0
        %v1451 = vadd.f32 0.0, %v1450
        %v1452 = vpop.f32.mrb[0].mxu0
        %v1453 = vpop.f32.mrb[0].mxu0
        %v1454 = vadd.f32 0.0, %v1453
        %v1455 = vpop.f32.mrb[0].mxu0
        %1456 = vmatprep.mubr.bf16.mxu0 0
        %1457 = vmatmul.mubr.bf16.gmra.mrb[0].mxu0 %v975
        %v1458 = vpop.f32.mrb[0].mxu0
        %v1459 = vadd.f32 0.0, %v1458
        %v1460 = vpop.f32.mrb[0].mxu0
        %v1461 = vpop.f32.mrb[0].mxu0
        %v1462 = vadd.f32 0.0, %v1461
        %v1463 = vpop.f32.mrb[0].mxu0
        %1464 = vmatprep.mubr.bf16.mxu0 0
        %1465 = vmatmul.mubr.bf16.gmra.mrb[0].mxu0 %v977
        %v1466 = vpop.f32.mrb[0].mxu0
        %v1467 = vadd.f32 0.0, %v1466
        %v1468 = vpop.f32.mrb[0].mxu0
        %v1469 = vpop.f32.mrb[0].mxu0
        %v1470 = vadd.f32 0.0, %v1469
        %v1471 = vpop.f32.mrb[0].mxu0
        %1472 = vmatprep.mubr.bf16.mxu0 0
        %1473 = vmatmul.mubr.bf16.gmra.mrb[0].mxu0 %v979
        %v1474 = vpop.f32.mrb[0].mxu0
        %v1475 = vadd.f32 0.0, %v1474
        %v1476 = vpop.f32.mrb[0].mxu0
        %v1477 = vpop.f32.mrb[0].mxu0
        %v1478 = vadd.f32 0.0, %v1477
        %v1479 = vpop.f32.mrb[0].mxu0
        %1480 = vmatprep.mubr.bf16.mxu0 0
        %1481 = vmatmul.mubr.bf16.gmra.mrb[0].mxu0 %v1151
        %v1482 = vpop.f32.mrb[0].mxu0
        %v1483 = vadd.f32 0.0, %v1482
        %v1484 = vpop.f32.mrb[0].mxu0
        %v1485 = vpop.f32.mrb[0].mxu0
        %v1486 = vadd.f32 0.0, %v1485
        %v1487 = vpop.f32.mrb[0].mxu0
        %1488 = vdwg.mxu0
        %v1489 = vadd.f32 %v1191, %v1363
        %v1490 = vadd.f32 %v1194, %v1366
        %v1491 = vadd.f32 %v1199, %v1371
        %v1492 = vadd.f32 %v1202, %v1374
        %v1493 = vadd.f32 %v1207, %v1379
        %v1494 = vadd.f32 %v1210, %v1382
        %v1495 = vadd.f32 %v1215, %v1387
        %v1496 = vadd.f32 %v1218, %v1390
        %v1497 = vadd.f32 %v1223, %v1395
        %v1498 = vadd.f32 %v1226, %v1398
        %v1499 = vadd.f32 %v1231, %v1403
        %v1500 = vadd.f32 %v1234, %v1406
        %v1501 = vadd.f32 %v1239, %v1411
        %v1502 = vadd.f32 %v1242, %v1414
        %v1503 = vadd.f32 %v1247, %v1419
        %v1504 = vadd.f32 %v1250, %v1422
        %v1505 = vadd.f32 %v1255, %v1427
        %v1506 = vadd.f32 %v1258, %v1430
        %v1507 = vadd.f32 %v1263, %v1435
        %v1508 = vadd.f32 %v1266, %v1438
        %v1509 = vadd.f32 %v1271, %v1443
        %v1510 = vadd.f32 %v1274, %v1446
        %v1511 = vadd.f32 %v1279, %v1451
        %v1512 = vadd.f32 %v1282, %v1454
        %v1513 = vadd.f32 %v1287, %v1459
        %v1514 = vadd.f32 %v1290, %v1462
        %v1515 = vadd.f32 %v1295, %v1467
        %v1516 = vadd.f32 %v1298, %v1470
        %v1517 = vadd.f32 %v1303, %v1475
        %v1518 = vadd.f32 %v1306, %v1478
        %v1519 = vadd.f32 %v1311, %v1483
        %v1520 = vadd.f32 %v1314, %v1486
        %v1521 = vld [vmem:[%s3] sm:$0x1]
        %v1523 = vlaneseq
        %v1524 = vshrl.u32 %v1523, 7
        %v1525 = vsub.s32 0, %v1524
        %v1526 = vrot.slane %v1521, %v1525
        %v1528 = vadd.f32 %v1489, %v1526
        %v1529 = vadd.f32 %v1490, %v1526
        %v1530 = vadd.f32 %v1491, %v1526
        %v1531 = vadd.f32 %v1492, %v1526
        %v1532 = vadd.f32 %v1493, %v1526
        %v1533 = vadd.f32 %v1494, %v1526
        %v1534 = vadd.f32 %v1495, %v1526
        %v1535 = vadd.f32 %v1496, %v1526
        %v1536 = vadd.f32 %v1497, %v1526
        %v1537 = vadd.f32 %v1498, %v1526
        %v1538 = vadd.f32 %v1499, %v1526
        %v1539 = vadd.f32 %v1500, %v1526
        %v1540 = vadd.f32 %v1501, %v1526
        %v1541 = vadd.f32 %v1502, %v1526
        %v1542 = vadd.f32 %v1503, %v1526
        %v1543 = vadd.f32 %v1504, %v1526
        %v1544 = vadd.f32 %v1505, %v1526
        %v1545 = vadd.f32 %v1506, %v1526
        %v1546 = vadd.f32 %v1507, %v1526
        %v1547 = vadd.f32 %v1508, %v1526
        %v1548 = vadd.f32 %v1509, %v1526
        %v1549 = vadd.f32 %v1510, %v1526
        %v1550 = vadd.f32 %v1511, %v1526
        %v1551 = vadd.f32 %v1512, %v1526
        %v1552 = vadd.f32 %v1513, %v1526
        %v1553 = vadd.f32 %v1514, %v1526
        %v1554 = vadd.f32 %v1515, %v1526
        %v1555 = vadd.f32 %v1516, %v1526
        %v1556 = vadd.f32 %v1517, %v1526
        %v1557 = vadd.f32 %v1518, %v1526
        %v1558 = vadd.f32 %v1519, %v1526
        %v1559 = vadd.f32 %v1520, %v1526
        %v1560 = vmax.f32 %v1528, 0.0
        %v1561 = vmax.f32 %v1529, 0.0
        %v1562 = vmax.f32 %v1530, 0.0
        %v1563 = vmax.f32 %v1531, 0.0
        %v1564 = vmax.f32 %v1532, 0.0
        %v1565 = vmax.f32 %v1533, 0.0
        %v1566 = vmax.f32 %v1534, 0.0
        %v1567 = vmax.f32 %v1535, 0.0
        %v1568 = vmax.f32 %v1536, 0.0
        %v1569 = vmax.f32 %v1537, 0.0
        %v1570 = vmax.f32 %v1538, 0.0
        %v1571 = vmax.f32 %v1539, 0.0
        %v1572 = vmax.f32 %v1540, 0.0
        %v1573 = vmax.f32 %v1541, 0.0
        %v1574 = vmax.f32 %v1542, 0.0
        %v1575 = vmax.f32 %v1543, 0.0
        %v1576 = vmax.f32 %v1544, 0.0
        %v1577 = vmax.f32 %v1545, 0.0
        %v1578 = vmax.f32 %v1546, 0.0
        %v1579 = vmax.f32 %v1547, 0.0
        %v1580 = vmax.f32 %v1548, 0.0
        %v1581 = vmax.f32 %v1549, 0.0
        %v1582 = vmax.f32 %v1550, 0.0
        %v1583 = vmax.f32 %v1551, 0.0
        %v1584 = vmax.f32 %v1552, 0.0
        %v1585 = vmax.f32 %v1553, 0.0
        %v1586 = vmax.f32 %v1554, 0.0
        %v1587 = vmax.f32 %v1555, 0.0
        %v1588 = vmax.f32 %v1556, 0.0
        %v1589 = vmax.f32 %v1557, 0.0
        %v1590 = vmax.f32 %v1558, 0.0
        %v1591 = vmax.f32 %v1559, 0.0
        %v1592 = vpack.c.bf16 %v1561, %v1560
        %v1593 = vpack.c.bf16 %v1563, %v1562
        %v1594 = vpack.c.bf16 %v1565, %v1564
        %v1595 = vpack.c.bf16 %v1567, %v1566
        %v1596 = vpack.c.bf16 %v1569, %v1568
        %v1597 = vpack.c.bf16 %v1571, %v1570
        %v1598 = vpack.c.bf16 %v1573, %v1572
        %v1599 = vpack.c.bf16 %v1575, %v1574
        %v1600 = vpack.c.bf16 %v1577, %v1576
        %v1601 = vpack.c.bf16 %v1579, %v1578
        %v1602 = vpack.c.bf16 %v1581, %v1580
        %v1603 = vpack.c.bf16 %v1583, %v1582
        %v1604 = vpack.c.bf16 %v1585, %v1584
        %v1605 = vpack.c.bf16 %v1587, %v1586
        %v1606 = vpack.c.bf16 %v1589, %v1588
        %v1607 = vpack.c.bf16 %v1591, %v1590
        %1608 = vrot.lane.b32.xlu0 %v320, 4
        %v1609 = vpop.permute.xlu0 %1608
        %1610 = vrot.lane.b32.xlu0 %v321, 4
        %v1611 = vpop.permute.xlu0 %1610
        %1612 = vrot.lane.b32.xlu0 %v322, 4
        %v1613 = vpop.permute.xlu0 %1612
        %1614 = vrot.lane.b32.xlu0 %v323, 4
        %v1615 = vpop.permute.xlu0 %1614
        %1616 = vrot.lane.b32.xlu0 %v324, 4
        %v1617 = vpop.permute.xlu0 %1616
        %1618 = vrot.lane.b32.xlu0 %v325, 4
        %v1619 = vpop.permute.xlu0 %1618
        %1620 = vrot.lane.b32.xlu0 %v326, 4
        %v1621 = vpop.permute.xlu0 %1620
        %1622 = vrot.lane.b32.xlu0 %v327, 4
        %v1623 = vpop.permute.xlu0 %1622
        %1624 = vrot.lane.b32.xlu0 %v328, 4
        %v1625 = vpop.permute.xlu0 %1624
        %1626 = vrot.lane.b32.xlu0 %v329, 4
        %v1627 = vpop.permute.xlu0 %1626
        %1628 = vrot.lane.b32.xlu0 %v330, 4
        %v1629 = vpop.permute.xlu0 %1628
        %1630 = vrot.lane.b32.xlu0 %v331, 4
        %v1631 = vpop.permute.xlu0 %1630
        %1632 = vrot.lane.b32.xlu0 %v332, 4
        %v1633 = vpop.permute.xlu0 %1632
        %1634 = vrot.lane.b32.xlu0 %v333, 4
        %v1635 = vpop.permute.xlu0 %1634
        %1636 = vrot.lane.b32.xlu0 %v334, 4
        %v1637 = vpop.permute.xlu0 %1636
        %1638 = vrot.lane.b32.xlu0 %v335, 4
        %v1639 = vpop.permute.xlu0 %1638
        %v1642 = vsel %vm868, %v1592, %v1609
        %v1645 = vsel %vm868, %v1593, %v1611
        %v1648 = vsel %vm868, %v1594, %v1613
        %v1651 = vsel %vm868, %v1595, %v1615
        %v1654 = vsel %vm868, %v1596, %v1617
        %v1657 = vsel %vm868, %v1597, %v1619
        %v1660 = vsel %vm868, %v1598, %v1621
        %v1663 = vsel %vm868, %v1599, %v1623
        %v1666 = vsel %vm868, %v1600, %v1625
        %v1669 = vsel %vm868, %v1601, %v1627
        %v1672 = vsel %vm868, %v1602, %v1629
        %v1675 = vsel %vm868, %v1603, %v1631
        %v1678 = vsel %vm868, %v1604, %v1633
        %v1681 = vsel %vm868, %v1605, %v1635
        %v1684 = vsel %vm868, %v1606, %v1637
        %v1687 = vsel %vm868, %v1607, %v1639
        %v1688 = vld [vmem:[%s2] sm:$0xf]
        %v1689 = vld [vmem:[%s4] sm:$0x1]
        %v1691 = vlaneseq
        %v1692 = vshrl.u32 %v1691, 7
        %v1693 = vsub.s32 0, %v1692
        %v1694 = vrot.slane %v1689, %v1693
        %v1696 = vsel %vm903, %v1642, 0
        %v1698 = vsel %vm903, %v1645, 0
        %v1700 = vsel %vm903, %v1648, 0
        %v1702 = vsel %vm903, %v1651, 0
        %v1704 = vsel %vm903, %v1654, 0
        %v1706 = vsel %vm903, %v1657, 0
        %v1708 = vsel %vm903, %v1660, 0
        %v1710 = vsel %vm903, %v1663, 0
        %v1712 = vsel %vm903, %v1666, 0
        %v1714 = vsel %vm903, %v1669, 0
        %v1716 = vsel %vm903, %v1672, 0
        %v1718 = vsel %vm903, %v1675, 0
        %v1720 = vsel %vm903, %v1678, 0
        %v1722 = vsel %vm903, %v1681, 0
        %v1724 = vsel %vm903, %v1684, 0
        %v1726 = vsel %vm903, %v1687, 0
        %vm1728 = vcmask 1043456
        %v1730 = vsel %vm1728, %v1688, 0
        %1732 = vmatprep.subr.bf16.mxu0 0
        %1733 = vmatpush1.bf16.msra.mxu0 %v1730
        %1734 = vmatprep.subr.bf16.mxu0 0
        %1735 = vmatpush1.bf16.msra.mxu0 0
        %1736 = vmatprep.subr.bf16.mxu0 0
        %1737 = vmatpush1.bf16.msra.mxu0 0
        %1738 = vmatprep.subr.bf16.mxu0 0
        %1739 = vmatpush1.bf16.msra.mxu0 0
        %1740 = vmatprep.subr.bf16.mxu0 0
        %1741 = vmatpush1.bf16.msra.mxu0 0
        %1742 = vmatprep.subr.bf16.mxu0 0
        %1743 = vmatpush1.bf16.msra.mxu0 0
        %1744 = vmatprep.subr.bf16.mxu0 0
        %1745 = vmatpush1.bf16.msra.mxu0 0
        %1746 = vmatprep.subr.bf16.mxu0 0
        %1747 = vmatpush1.bf16.msra.mxu0 0
        %1748 = vmatprep.subr.bf16.mxu0 0
        %1749 = vmatpush1.bf16.msra.mxu0 0
        %1750 = vmatprep.subr.bf16.mxu0 0
        %1751 = vmatpush1.bf16.msra.mxu0 0
        %1752 = vmatprep.subr.bf16.mxu0 0
        %1753 = vmatpush1.bf16.msra.mxu0 0
        %1754 = vmatprep.subr.bf16.mxu0 0
        %1755 = vmatpush1.bf16.msra.mxu0 0
        %1756 = vmatprep.subr.bf16.mxu0 0
        %1757 = vmatpush1.bf16.msra.mxu0 0
        %1758 = vmatprep.subr.bf16.mxu0 0
        %1759 = vmatpush1.bf16.msra.mxu0 0
        %1760 = vmatprep.subr.bf16.mxu0 0
        %1761 = vmatpush1.bf16.msra.mxu0 0
        %1762 = vmatprep.subr.bf16.mxu0 0
        %1763 = vmatpush1.bf16.msra.mxu0 0
        %1764 = vmatprep.mubr.bf16.mxu0 0
        %1765 = vmatmul.mubr.bf16.gmra.mrb[0].mxu0 %v1696
        %v1766 = vpop.f32.mrb[0].mxu0
        %v1767 = vadd.f32 %v1694, %v1766
        %v1768 = vpop.f32.mrb[0].mxu0
        %v1769 = vpop.f32.mrb[0].mxu0
        %v1770 = vadd.f32 %v1694, %v1769
        %v1771 = vpop.f32.mrb[0].mxu0
        %1772 = vmatprep.mubr.bf16.mxu0 0
        %1773 = vmatmul.mubr.bf16.gmra.mrb[0].mxu0 %v1698
        %v1774 = vpop.f32.mrb[0].mxu0
        %v1775 = vadd.f32 %v1694, %v1774
        %v1776 = vpop.f32.mrb[0].mxu0
        %v1777 = vpop.f32.mrb[0].mxu0
        %v1778 = vadd.f32 %v1694, %v1777
        %v1779 = vpop.f32.mrb[0].mxu0
        %1780 = vmatprep.mubr.bf16.mxu0 0
        %1781 = vmatmul.mubr.bf16.gmra.mrb[0].mxu0 %v1700
        %v1782 = vpop.f32.mrb[0].mxu0
        %v1783 = vadd.f32 %v1694, %v1782
        %v1784 = vpop.f32.mrb[0].mxu0
        %v1785 = vpop.f32.mrb[0].mxu0
        %v1786 = vadd.f32 %v1694, %v1785
        %v1787 = vpop.f32.mrb[0].mxu0
        %1788 = vmatprep.mubr.bf16.mxu0 0
        %1789 = vmatmul.mubr.bf16.gmra.mrb[0].mxu0 %v1702
        %v1790 = vpop.f32.mrb[0].mxu0
        %v1791 = vadd.f32 %v1694, %v1790
        %v1792 = vpop.f32.mrb[0].mxu0
        %v1793 = vpop.f32.mrb[0].mxu0
        %v1794 = vadd.f32 %v1694, %v1793
        %v1795 = vpop.f32.mrb[0].mxu0
        %1796 = vmatprep.mubr.bf16.mxu0 0
        %1797 = vmatmul.mubr.bf16.gmra.mrb[0].mxu0 %v1704
        %v1798 = vpop.f32.mrb[0].mxu0
        %v1799 = vadd.f32 %v1694, %v1798
        %v1800 = vpop.f32.mrb[0].mxu0
        %v1801 = vpop.f32.mrb[0].mxu0
        %v1802 = vadd.f32 %v1694, %v1801
        %v1803 = vpop.f32.mrb[0].mxu0
        %1804 = vmatprep.mubr.bf16.mxu0 0
        %1805 = vmatmul.mubr.bf16.gmra.mrb[0].mxu0 %v1706
        %v1806 = vpop.f32.mrb[0].mxu0
        %v1807 = vadd.f32 %v1694, %v1806
        %v1808 = vpop.f32.mrb[0].mxu0
        %v1809 = vpop.f32.mrb[0].mxu0
        %v1810 = vadd.f32 %v1694, %v1809
        %v1811 = vpop.f32.mrb[0].mxu0
        %1812 = vmatprep.mubr.bf16.mxu0 0
        %1813 = vmatmul.mubr.bf16.gmra.mrb[0].mxu0 %v1708
        %v1814 = vpop.f32.mrb[0].mxu0
        %v1815 = vadd.f32 %v1694, %v1814
        %v1816 = vpop.f32.mrb[0].mxu0
        %v1817 = vpop.f32.mrb[0].mxu0
        %v1818 = vadd.f32 %v1694, %v1817
        %v1819 = vpop.f32.mrb[0].mxu0
        %1820 = vmatprep.mubr.bf16.mxu0 0
        %1821 = vmatmul.mubr.bf16.gmra.mrb[0].mxu0 %v1710
        %v1822 = vpop.f32.mrb[0].mxu0
        %v1823 = vadd.f32 %v1694, %v1822
        %v1824 = vpop.f32.mrb[0].mxu0
        %v1825 = vpop.f32.mrb[0].mxu0
        %v1826 = vadd.f32 %v1694, %v1825
        %v1827 = vpop.f32.mrb[0].mxu0
        %1828 = vmatprep.mubr.bf16.mxu0 0
        %1829 = vmatmul.mubr.bf16.gmra.mrb[0].mxu0 %v1712
        %v1830 = vpop.f32.mrb[0].mxu0
        %v1831 = vadd.f32 %v1694, %v1830
        %v1832 = vpop.f32.mrb[0].mxu0
        %v1833 = vpop.f32.mrb[0].mxu0
        %v1834 = vadd.f32 %v1694, %v1833
        %v1835 = vpop.f32.mrb[0].mxu0
        %1836 = vmatprep.mubr.bf16.mxu0 0
        %1837 = vmatmul.mubr.bf16.gmra.mrb[0].mxu0 %v1714
        %v1838 = vpop.f32.mrb[0].mxu0
        %v1839 = vadd.f32 %v1694, %v1838
        %v1840 = vpop.f32.mrb[0].mxu0
        %v1841 = vpop.f32.mrb[0].mxu0
        %v1842 = vadd.f32 %v1694, %v1841
        %v1843 = vpop.f32.mrb[0].mxu0
        %1844 = vmatprep.mubr.bf16.mxu0 0
        %1845 = vmatmul.mubr.bf16.gmra.mrb[0].mxu0 %v1716
        %v1846 = vpop.f32.mrb[0].mxu0
        %v1847 = vadd.f32 %v1694, %v1846
        %v1848 = vpop.f32.mrb[0].mxu0
        %v1849 = vpop.f32.mrb[0].mxu0
        %v1850 = vadd.f32 %v1694, %v1849
        %v1851 = vpop.f32.mrb[0].mxu0
        %1852 = vmatprep.mubr.bf16.mxu0 0
        %1853 = vmatmul.mubr.bf16.gmra.mrb[0].mxu0 %v1718
        %v1854 = vpop.f32.mrb[0].mxu0
        %v1855 = vadd.f32 %v1694, %v1854
        %v1856 = vpop.f32.mrb[0].mxu0
        %v1857 = vpop.f32.mrb[0].mxu0
        %v1858 = vadd.f32 %v1694, %v1857
        %v1859 = vpop.f32.mrb[0].mxu0
        %1860 = vmatprep.mubr.bf16.mxu0 0
        %1861 = vmatmul.mubr.bf16.gmra.mrb[0].mxu0 %v1720
        %v1862 = vpop.f32.mrb[0].mxu0
        %v1863 = vadd.f32 %v1694, %v1862
        %v1864 = vpop.f32.mrb[0].mxu0
        %v1865 = vpop.f32.mrb[0].mxu0
        %v1866 = vadd.f32 %v1694, %v1865
        %v1867 = vpop.f32.mrb[0].mxu0
        %1868 = vmatprep.mubr.bf16.mxu0 0
        %1869 = vmatmul.mubr.bf16.gmra.mrb[0].mxu0 %v1722
        %v1870 = vpop.f32.mrb[0].mxu0
        %v1871 = vadd.f32 %v1694, %v1870
        %v1872 = vpop.f32.mrb[0].mxu0
        %v1873 = vpop.f32.mrb[0].mxu0
        %v1874 = vadd.f32 %v1694, %v1873
        %v1875 = vpop.f32.mrb[0].mxu0
        %1876 = vmatprep.mubr.bf16.mxu0 0
        %1877 = vmatmul.mubr.bf16.gmra.mrb[0].mxu0 %v1724
        %v1878 = vpop.f32.mrb[0].mxu0
        %v1879 = vadd.f32 %v1694, %v1878
        %v1880 = vpop.f32.mrb[0].mxu0
        %v1881 = vpop.f32.mrb[0].mxu0
        %v1882 = vadd.f32 %v1694, %v1881
        %v1883 = vpop.f32.mrb[0].mxu0
        %1884 = vmatprep.mubr.bf16.mxu0 0
        %1885 = vmatmul.mubr.bf16.gmra.mrb[0].mxu0 %v1726
        %v1886 = vpop.f32.mrb[0].mxu0
        %v1887 = vadd.f32 %v1694, %v1886
        %v1888 = vpop.f32.mrb[0].mxu0
        %v1889 = vpop.f32.mrb[0].mxu0
        %v1890 = vadd.f32 %v1694, %v1889
        %v1891 = vpop.f32.mrb[0].mxu0
        %1892 = vdwg.mxu0
        %v1893 = vmax.f32 %v1767, 0.0
        %v1894 = vmax.f32 %v1770, 0.0
        %v1895 = vmax.f32 %v1775, 0.0
        %v1896 = vmax.f32 %v1778, 0.0
        %v1897 = vmax.f32 %v1783, 0.0
        %v1898 = vmax.f32 %v1786, 0.0
        %v1899 = vmax.f32 %v1791, 0.0
        %v1900 = vmax.f32 %v1794, 0.0
        %v1901 = vmax.f32 %v1799, 0.0
        %v1902 = vmax.f32 %v1802, 0.0
        %v1903 = vmax.f32 %v1807, 0.0
        %v1904 = vmax.f32 %v1810, 0.0
        %v1905 = vmax.f32 %v1815, 0.0
        %v1906 = vmax.f32 %v1818, 0.0
        %v1907 = vmax.f32 %v1823, 0.0
        %v1908 = vmax.f32 %v1826, 0.0
        %v1909 = vmax.f32 %v1831, 0.0
        %v1910 = vmax.f32 %v1834, 0.0
        %v1911 = vmax.f32 %v1839, 0.0
        %v1912 = vmax.f32 %v1842, 0.0
        %v1913 = vmax.f32 %v1847, 0.0
        %v1914 = vmax.f32 %v1850, 0.0
        %v1915 = vmax.f32 %v1855, 0.0
        %v1916 = vmax.f32 %v1858, 0.0
        %v1917 = vmax.f32 %v1863, 0.0
        %v1918 = vmax.f32 %v1866, 0.0
        %v1919 = vmax.f32 %v1871, 0.0
        %v1920 = vmax.f32 %v1874, 0.0
        %v1921 = vmax.f32 %v1879, 0.0
        %v1922 = vmax.f32 %v1882, 0.0
        %v1923 = vmax.f32 %v1887, 0.0
        %v1924 = vmax.f32 %v1890, 0.0
        %v1925 = vpack.c.bf16 %v1894, %v1893
        %v1926 = vpack.c.bf16 %v1896, %v1895
        %v1927 = vpack.c.bf16 %v1898, %v1897
        %v1928 = vpack.c.bf16 %v1900, %v1899
        %v1929 = vpack.c.bf16 %v1902, %v1901
        %v1930 = vpack.c.bf16 %v1904, %v1903
        %v1931 = vpack.c.bf16 %v1906, %v1905
        %v1932 = vpack.c.bf16 %v1908, %v1907
        %v1933 = vpack.c.bf16 %v1910, %v1909
        %v1934 = vpack.c.bf16 %v1912, %v1911
        %v1935 = vpack.c.bf16 %v1914, %v1913
        %v1936 = vpack.c.bf16 %v1916, %v1915
        %v1937 = vpack.c.bf16 %v1918, %v1917
        %v1938 = vpack.c.bf16 %v1920, %v1919
        %v1939 = vpack.c.bf16 %v1922, %v1921
        %v1940 = vpack.c.bf16 %v1924, %v1923
        %v1957 = vunpack.c.l.b16 %v1925
        %v1958 = vunpack.c.h.b16 %v1925
        %v1959 = vunpack.c.l.b16 %v1926
        %v1960 = vunpack.c.h.b16 %v1926
        %v1961 = vunpack.c.l.b16 %v1927
        %v1962 = vunpack.c.h.b16 %v1927
        %v1963 = vunpack.c.l.b16 %v1928
        %v1964 = vunpack.c.h.b16 %v1928
        %v1965 = vunpack.c.l.b16 %v1929
        %v1966 = vunpack.c.h.b16 %v1929
        %v1967 = vunpack.c.l.b16 %v1930
        %v1968 = vunpack.c.h.b16 %v1930
        %v1969 = vunpack.c.l.b16 %v1931
        %v1970 = vunpack.c.h.b16 %v1931
        %v1971 = vunpack.c.l.b16 %v1932
        %v1972 = vunpack.c.h.b16 %v1932
        %v1973 = vunpack.c.l.b16 %v1933
        %v1974 = vunpack.c.h.b16 %v1933
        %v1975 = vunpack.c.l.b16 %v1934
        %v1976 = vunpack.c.h.b16 %v1934
        %v1977 = vunpack.c.l.b16 %v1935
        %v1978 = vunpack.c.h.b16 %v1935
        %v1979 = vunpack.c.l.b16 %v1936
        %v1980 = vunpack.c.h.b16 %v1936
        %v1981 = vunpack.c.l.b16 %v1937
        %v1982 = vunpack.c.h.b16 %v1937
        %v1983 = vunpack.c.l.b16 %v1938
        %v1984 = vunpack.c.h.b16 %v1938
        %v1985 = vunpack.c.l.b16 %v1939
        %v1986 = vunpack.c.h.b16 %v1939
        %v1987 = vunpack.c.l.b16 %v1940
        %v1988 = vunpack.c.h.b16 %v1940
        %v1989 = vpack.c.b16 %v1957, %v1957
        %v1990 = vpack.c.b16 %v1958, %v1958
        %v1991 = vpack.c.b16 %v1959, %v1959
        %v1992 = vpack.c.b16 %v1960, %v1960
        %v1993 = vpack.c.b16 %v1961, %v1961
        %v1994 = vpack.c.b16 %v1962, %v1962
        %v1995 = vpack.c.b16 %v1963, %v1963
        %v1996 = vpack.c.b16 %v1964, %v1964
        %v1997 = vpack.c.b16 %v1965, %v1965
        %v1998 = vpack.c.b16 %v1966, %v1966
        %v1999 = vpack.c.b16 %v1967, %v1967
        %v2000 = vpack.c.b16 %v1968, %v1968
        %v2001 = vpack.c.b16 %v1969, %v1969
        %v2002 = vpack.c.b16 %v1970, %v1970
        %v2003 = vpack.c.b16 %v1971, %v1971
        %v2004 = vpack.c.b16 %v1972, %v1972
        %v2005 = vpack.c.b16 %v1973, %v1973
        %v2006 = vpack.c.b16 %v1974, %v1974
        %v2007 = vpack.c.b16 %v1975, %v1975
        %v2008 = vpack.c.b16 %v1976, %v1976
        %v2009 = vpack.c.b16 %v1977, %v1977
        %v2010 = vpack.c.b16 %v1978, %v1978
        %v2011 = vpack.c.b16 %v1979, %v1979
        %v2012 = vpack.c.b16 %v1980, %v1980
        %v2013 = vpack.c.b16 %v1981, %v1981
        %v2014 = vpack.c.b16 %v1982, %v1982
        %v2015 = vpack.c.b16 %v1983, %v1983
        %v2016 = vpack.c.b16 %v1984, %v1984
        %v2017 = vpack.c.b16 %v1985, %v1985
        %v2018 = vpack.c.b16 %v1986, %v1986
        %v2019 = vpack.c.b16 %v1987, %v1987
        %v2020 = vpack.c.b16 %v1988, %v1988
        %vm2053 = vcmask 125952
        %2054 = vst.msk [vmem:[%s217] sm:$0xf] %vm2053, %v1989
        %2055 = vst.msk [vmem:[%s217 + $0x4] sm:$0xf] %vm2053, %v1990
        %2056 = vst.msk [vmem:[%s217 + $0x8] sm:$0xf] %vm2053, %v1991
        %2057 = vst.msk [vmem:[%s217 + $0xc] sm:$0xf] %vm2053, %v1992
        %2058 = vst.msk [vmem:[%s217 + $0x10] sm:$0xf] %vm2053, %v1993
        %2059 = vst.msk [vmem:[%s217 + $0x14] sm:$0xf] %vm2053, %v1994
        %2060 = vst.msk [vmem:[%s217 + $0x18] sm:$0xf] %vm2053, %v1995
        %2061 = vst.msk [vmem:[%s217 + $0x1c] sm:$0xf] %vm2053, %v1996
        %2062 = vst.msk [vmem:[%s217 + $0x20] sm:$0xf] %vm2053, %v1997
        %2063 = vst.msk [vmem:[%s217 + $0x24] sm:$0xf] %vm2053, %v1998
        %2064 = vst.msk [vmem:[%s217 + $0x28] sm:$0xf] %vm2053, %v1999
        %2065 = vst.msk [vmem:[%s217 + $0x2c] sm:$0xf] %vm2053, %v2000
        %2066 = vst.msk [vmem:[%s217 + $0x30] sm:$0xf] %vm2053, %v2001
        %2067 = vst.msk [vmem:[%s217 + $0x34] sm:$0xf] %vm2053, %v2002
        %2068 = vst.msk [vmem:[%s217 + $0x38] sm:$0xf] %vm2053, %v2003
        %2069 = vst.msk [vmem:[%s217 + $0x3c] sm:$0xf] %vm2053, %v2004
        %2070 = vst.msk [vmem:[%s217 + $0x40] sm:$0xf] %vm2053, %v2005
        %2071 = vst.msk [vmem:[%s217 + $0x44] sm:$0xf] %vm2053, %v2006
        %2072 = vst.msk [vmem:[%s217 + $0x48] sm:$0xf] %vm2053, %v2007
        %2073 = vst.msk [vmem:[%s217 + $0x4c] sm:$0xf] %vm2053, %v2008
        %2074 = vst.msk [vmem:[%s217 + $0x50] sm:$0xf] %vm2053, %v2009
        %2075 = vst.msk [vmem:[%s217 + $0x54] sm:$0xf] %vm2053, %v2010
        %2076 = vst.msk [vmem:[%s217 + $0x58] sm:$0xf] %vm2053, %v2011
        %2077 = vst.msk [vmem:[%s217 + $0x5c] sm:$0xf] %vm2053, %v2012
        %2078 = vst.msk [vmem:[%s217 + $0x60] sm:$0xf] %vm2053, %v2013
        %2079 = vst.msk [vmem:[%s217 + $0x64] sm:$0xf] %vm2053, %v2014
        %2080 = vst.msk [vmem:[%s217 + $0x68] sm:$0xf] %vm2053, %v2015
        %2081 = vst.msk [vmem:[%s217 + $0x6c] sm:$0xf] %vm2053, %v2016
        %2082 = vst.msk [vmem:[%s217 + $0x70] sm:$0xf] %vm2053, %v2017
        %2083 = vst.msk [vmem:[%s217 + $0x74] sm:$0xf] %vm2053, %v2018
        %2084 = vst.msk [vmem:[%s217 + $0x78] sm:$0xf] %vm2053, %v2019
        %2085 = vst.msk [vmem:[%s217 + $0x7c] sm:$0xf] %vm2053, %v2020
        %s2086 = sand.u32 %s137, 1
        %s2087 = scalar_lea.sflag [#allocation3], %s2086
        %s2088 = sand.u32 %s137, 1
        %s2089 = smul.addr %s2088, 128
        %s2090 = scalar_lea.vmem [#allocation2], %s2089
        // Predicated region
        $region41: #{bottleneck_forward.1} parent=39 // pred_check
          %p2091 = pneg %p147
        $region42: #{bottleneck_forward.1} parent=39 // pred_check_branch
          %2093 = sbr.rel (%p2091) target = $region44
        $region43: #{bottleneck_forward.1} parent=39 // pred_region
          %s2095 = ssub.s32 2048, 2048
          %2096 = vsyncadd %s2087, %s2095
          %s2097 = smul.addr %s19, 32
          %s2098 = smul.addr %s2097, 64
          %s2099 = scalar_lea.hbm %s5, %s2098
          %s2100 = sshll.u32 %s2090, 4
          %s2101 = int_to_ptr.vmem [resolvable:$true] %s2100
          %2106 = dma.vmem_to_hbm [thread:$0]  %s2101, 2048, %s2099, %s2087, 64, 64, 4
        $region44: #{bottleneck_forward.1} parent=39 // pred_fallthru
          _
      $region40: #{bottleneck_forward.1} parent=5 // pred_fallthru
        _
      %p2107 = scmp.le.s32.totalorder 2, %s14
      // Predicated region
      $region45: #{bottleneck_forward.1} parent=5 // pred_check
        %p2108 = pneg %p2107
      $region46: #{bottleneck_forward.1} parent=5 // pred_check_branch
        %2110 = sbr.rel (%p2108) target = $region48
      $region47: #{bottleneck_forward.1} parent=5 // pred_region
        %s2111 = ssub.s32 %s14, 2
        // Predicated region
        $region49: #{bottleneck_forward.1} parent=47 // pred_check
          %p2112 = pneg %p153
        $region50: #{bottleneck_forward.1} parent=47 // pred_check_branch
          %2114 = sbr.rel (%p2112) target = $region52
        $region51: #{bottleneck_forward.1} parent=47 // pred_region
          %s2115 = sand.u32 %s138, 1
          %s2116 = scalar_lea.sflag [#allocation3], %s2115
          %s2117 = sand.u32 %s138, 1
          %s2118 = smul.addr %s2117, 128
          %s2119 = scalar_lea.vmem [#allocation2], %s2118
          %2120 = dma.done %s2116, 2048
        $region52: #{bottleneck_forward.1} parent=47 // pred_fallthru
          _
      $region48: #{bottleneck_forward.1} parent=5 // pred_fallthru
        _
    $region6: #{bottleneck_forward.1} parent=1 // loop_footer
      %s18 = sadd.s32 1, %s14
    $region7: #{bottleneck_forward.1} parent=1 // loop_footer_branch
      %13 = sbr.rel target = $region3
    $region8: #{bottleneck_forward.1} parent=1 // loop_exit
      _
    %2121 = vsyncpa [#allocation3], 1
    %s2122 = scalar_lea.sflag [#allocation3], 1
    %2123 = vsyncpa %s2122, 1

</llo_original>
